<compile_context>
chip_gen: v5e
topology: v5e:2x2
jax: 0.10.0
libtpu: 0.0.40
codegen_flags: <defaults>
</compile_context>

<pallas_src>
import jax
import jax.numpy as jnp
from jax.experimental import pallas as pl
from jax.experimental.pallas import tpu as pltpu

# --- problem sizes (small, consistent with the module) ---
BATCH = 8
CHANNELS = 4
IMG_SIZE = 16
IN_DIM = CHANNELS * IMG_SIZE * IMG_SIZE   # 1024
HIDDEN = 512
LATENT = 32
HEAD_PAD = 2 * LATENT                     # fused mu|logvar head: 64 lanes (was 128)
BN_EPS = 1e-5
LEAK = 0.2


def _leaky_relu(x):
    return jnp.where(x > 0, x, LEAK * x)


def _unpack_vecs(vecs):
    b1 = vecs[0:1, :]
    b2 = vecs[1:2, :]
    gamma = vecs[2:3, :]
    beta = vecs[3:4, :]
    bhead = vecs[4:5, :HEAD_PAD]          # (1, 64): [bmu | blogvar]
    return b1, b2, gamma, beta, bhead


# ------------- single-block kernel: whole batch in one grid step (small B) -----------

def encoder_kernel_single(x_ref, w1_ref, w2_ref, wh_ref, vecs_ref, eps_ref, z_ref):
    b1, b2, gamma, beta, bhead = _unpack_vecs(vecs_ref[...])

    # Linear(D, 512) + LeakyReLU(0.2)  -- bf16 inputs/weights, f32 MXU accumulation
    h = jnp.dot(x_ref[...], w1_ref[...], preferred_element_type=jnp.float32) + b1
    h = _leaky_relu(h)

    # Linear(512, 512)
    h = jnp.dot(h.astype(jnp.bfloat16), w2_ref[...],
                preferred_element_type=jnp.float32) + b2

    # BatchNorm1d(512), training mode: biased batch statistics (two-pass, f32)
    mean = jnp.mean(h, axis=0, keepdims=True)
    var = jnp.mean((h - mean) * (h - mean), axis=0, keepdims=True)
    h = (h - mean) * jax.lax.rsqrt(var + BN_EPS) * gamma + beta
    h = _leaky_relu(h)

    # Fused mu/logvar head: one (512, 64) matmul, then slice.
    head = jnp.dot(h.astype(jnp.bfloat16), wh_ref[...],
                   preferred_element_type=jnp.float32) + bhead
    mu = head[:, :LATENT]
    logvar = head[:, LATENT:2 * LATENT]

    # reparameterization: z = eps * exp(logvar / 2) + mu
    z_ref[...] = eps_ref[...] * jnp.exp(logvar * 0.5) + mu


# ------------- batch-tiled two-pass kernel: weights resident across blocks -----------

def _make_tiled_kernel(total_rows):
    inv_n = 1.0 / float(total_rows)

    def kernel(x_ref, w1_ref, w2_ref, wh_ref, vecs_ref, eps_ref, z_ref,
               sum_ref, sqsum_ref, mean_ref, rstd_ref):
        p = pl.program_id(0)              # 0 = stats pass, 1 = finalize pass
        i = pl.program_id(1)              # batch block
        nb = pl.num_programs(1)
        b1, b2, gamma, beta, bhead = _unpack_vecs(vecs_ref[...])

        def pre_bn():
            h = jnp.dot(x_ref[...], w1_ref[...],
                        preferred_element_type=jnp.float32) + b1
            h = _leaky_relu(h)
            return jnp.dot(h.astype(jnp.bfloat16), w2_ref[...],
                           preferred_element_type=jnp.float32) + b2

        @pl.when(p == 0)
        def _():
            @pl.when(i == 0)
            def _():
                sum_ref[...] = jnp.zeros_like(sum_ref)
                sqsum_ref[...] = jnp.zeros_like(sqsum_ref)

            h = pre_bn()
            sum_ref[...] += jnp.sum(h, axis=0, keepdims=True)
            sqsum_ref[...] += jnp.sum(h * h, axis=0, keepdims=True)

            @pl.when(i == nb - 1)
            def _():
                mean = sum_ref[...] * inv_n
                # one-pass variance, clamped against tiny negative values
                var = jnp.maximum(sqsum_ref[...] * inv_n - mean * mean, 0.0)
                mean_ref[...] = mean
                rstd_ref[...] = jax.lax.rsqrt(var + BN_EPS)

            z_ref[...] = jnp.zeros_like(z_ref)   # placeholder; overwritten in pass 1

        @pl.when(p == 1)
        def _():
            h = pre_bn()                          # recompute: weights are VMEM-resident
            h = (h - mean_ref[...]) * rstd_ref[...] * gamma + beta
            h = _leaky_relu(h)
            head = jnp.dot(h.astype(jnp.bfloat16), wh_ref[...],
                           preferred_element_type=jnp.float32) + bhead
            mu = head[:, :LATENT]
            logvar = head[:, LATENT:2 * LATENT]
            z_ref[...] = eps_ref[...] * jnp.exp(logvar * 0.5) + mu

    return kernel


# ---------------------------------- wrapper ------------------------------------------

def encoder_forward(img, w1, w2, whead, vecs, eps, *, batch_block=None):
    """img: (B,C,H,W) f32; w1/w2/whead: bf16; vecs: (5,512) f32; eps: (B,LATENT) f32.
    batch_block=None -> whole batch in one grid step (best for small B);
    batch_block=tb   -> two-pass batch-tiled kernel with weights resident."""
    b = img.shape[0]
    x = img.reshape(b, -1).astype(jnp.bfloat16)   # halve input DMA; MXU input dtype

    if batch_block is None or batch_block >= b:
        def full(a):
            return pl.BlockSpec(a.shape, lambda i: (0,) * a.ndim)
        ins = [x, w1, w2, whead, vecs, eps]
        return pl.pallas_call(
            encoder_kernel_single,
            out_shape=jax.ShapeDtypeStruct((b, LATENT), jnp.float32),
            grid=(1,),
            in_specs=[full(a) for a in ins],
            out_specs=pl.BlockSpec((b, LATENT), lambda i: (0, 0)),
            compiler_params=pltpu.CompilerParams(
                dimension_semantics=("arbitrary",),
                vmem_limit_bytes=32 * 1024 * 1024),
        )(*ins)

    tb = batch_block
    assert b % tb == 0 and tb % 8 == 0, "batch_block must divide B and be a multiple of 8"
    nb = b // tb

    def resident(a):  # constant block index -> single DMA, stays VMEM-resident
        return pl.BlockSpec(a.shape, lambda p, i: (0,) * a.ndim)

    return pl.pallas_call(
        _make_tiled_kernel(b),
        out_shape=jax.ShapeDtypeStruct((b, LATENT), jnp.float32),
        grid=(2, nb),
        in_specs=[pl.BlockSpec((tb, IN_DIM), lambda p, i: (i, 0)),
                  resident(w1), resident(w2), resident(whead), resident(vecs),
                  pl.BlockSpec((tb, LATENT), lambda p, i: (i, 0))],
        out_specs=pl.BlockSpec((tb, LATENT), lambda p, i: (i, 0)),
        scratch_shapes=[pltpu.VMEM((1, HIDDEN), jnp.float32),   # sum
                        pltpu.VMEM((1, HIDDEN), jnp.float32),   # sum of squares
                        pltpu.VMEM((1, HIDDEN), jnp.float32),   # mean
                        pltpu.VMEM((1, HIDDEN), jnp.float32)],  # rstd
        compiler_params=pltpu.CompilerParams(
            # stats carry across both axes -> "arbitrary" (megacore split would need a
            # cross-core BN-stats reduction; see TODOs)
            dimension_semantics=("arbitrary", "arbitrary"),
            vmem_limit_bytes=32 * 1024 * 1024),
    )(x, w1, w2, whead, vecs, eps)


# ----------------------------- params / reference ------------------------------------

def init_params(key):
    """PyTorch nn.Linear default init U(-1/sqrt(fan_in), 1/sqrt(fan_in)).
    Weights stored transposed (in, out) and cast to bf16; per-feature vectors packed
    into one (5, 512) f32 array: rows = [b1, b2, gamma, beta, padded head bias]."""
    ks = jax.random.split(key, 8)

    def lin(kw, kb, fan_in, fan_out):
        bound = 1.0 / (fan_in ** 0.5)
        w = jax.random.uniform(kw, (fan_in, fan_out), jnp.float32, -bound, bound)
        b = jax.random.uniform(kb, (fan_out,), jnp.float32, -bound, bound)
        return w, b

    w1, b1 = lin(ks[0], ks[1], IN_DIM, HIDDEN)
    w2, b2 = lin(ks[2], ks[3], HIDDEN, HIDDEN)
    wmu, bmu = lin(ks[4], ks[5], HIDDEN, LATENT)
    wlv, blv = lin(ks[6], ks[7], HIDDEN, LATENT)
    gamma = jnp.ones((HIDDEN,), jnp.float32)
    beta = jnp.zeros((HIDDEN,), jnp.float32)

    # Fused mu|logvar head weight / bias, 64 lanes (no extra padding DMA'd from HBM).
    whead = jnp.concatenate([wmu, wlv], axis=1)                  # (512, 64)
    bhead = jnp.concatenate([bmu, blv], axis=0)                  # (64,)

    vecs = jnp.zeros((5, HIDDEN), jnp.float32)
    vecs = vecs.at[0].set(b1).at[1].set(b2).at[2].set(gamma).at[3].set(beta)
    vecs = vecs.at[4, :HEAD_PAD].set(bhead)

    return (w1.astype(jnp.bfloat16),
            w2.astype(jnp.bfloat16),
            whead.astype(jnp.bfloat16),
            vecs)


def encoder_reference(img, w1, w2, whead, vecs, eps):
    """Plain-JAX reference at matching (bf16-weight) precision."""
    b = img.shape[0]
    x = img.reshape(b, -1).astype(jnp.bfloat16)
    b1, b2, gamma, beta, bhead = _unpack_vecs(vecs)
    h = jnp.dot(x, w1, preferred_element_type=jnp.float32) + b1
    h = jnp.where(h > 0, h, LEAK * h)
    h = jnp.dot(h.astype(jnp.bfloat16), w2, preferred_element_type=jnp.float32) + b2
    m = h.mean(0, keepdims=True)
    v = ((h - m) ** 2).mean(0, keepdims=True)
    h = (h - m) * jax.lax.rsqrt(v + BN_EPS) * gamma + beta
    h = jnp.where(h > 0, h, LEAK * h)
    head = jnp.dot(h.astype(jnp.bfloat16), whead, preferred_element_type=jnp.float32) + bhead
    return eps * jnp.exp(head[:, LATENT:2 * LATENT] * 0.5) + head[:, :LATENT]


if __name__ == "__main__":
    root = jax.random.PRNGKey(0)
    k_img, k_params, k_eps, k_img2, k_eps2 = jax.random.split(root, 5)

    w1, w2, whead, vecs = init_params(k_params)

    # --- small-batch path: single grid step, whole batch + weights VMEM-resident ---
    img = jax.random.normal(k_img, (BATCH, CHANNELS, IMG_SIZE, IMG_SIZE), jnp.float32)
    eps = jax.random.normal(k_eps, (BATCH, LATENT), jnp.float32)
    z = encoder_forward(img, w1, w2, whead, vecs, eps)
    jax.block_until_ready(z)
    assert z.shape == (BATCH, LATENT) and z.dtype == jnp.float32
    z_ref = encoder_reference(img, w1, w2, whead, vecs, eps)
    assert jnp.allclose(z, z_ref, atol=1e-2, rtol=1e-2), \
        float(jnp.max(jnp.abs(z - z_ref)))

    # --- batch-tiled two-pass path: amortizes weight DMA across batch blocks ---
    big_b = 64
    img2 = jax.random.normal(k_img2, (big_b, CHANNELS, IMG_SIZE, IMG_SIZE), jnp.float32)
    eps2 = jax.random.normal(k_eps2, (big_b, LATENT), jnp.float32)
    z2 = encoder_forward(img2, w1, w2, whead, vecs, eps2, batch_block=16)
    jax.block_until_ready(z2)
    assert z2.shape == (big_b, LATENT)
    z2_ref = encoder_reference(img2, w1, w2, whead, vecs, eps2)
    assert jnp.allclose(z2, z2_ref, atol=1e-2, rtol=1e-2), \
        float(jnp.max(jnp.abs(z2 - z2_ref)))

    print("KERNEL_OK")
</pallas_src>

<mosaic_0001>
module attributes {stable_mosaic.version = 11 : i64} {
  func.func @encoder_kernel_single(%arg0: i32, %arg1: memref<8x1024xbf16, #tpu.memory_space<vmem>>, %arg2: memref<1024x512xbf16, #tpu.memory_space<vmem>>, %arg3: memref<512x512xbf16, #tpu.memory_space<vmem>>, %arg4: memref<512x64xbf16, #tpu.memory_space<vmem>>, %arg5: memref<5x512xf32, #tpu.memory_space<vmem>>, %arg6: memref<8x32xf32, #tpu.memory_space<vmem>>, %arg7: memref<8x32xf32, #tpu.memory_space<vmem>>) attributes {dimension_semantics = [#tpu.dimension_semantics<arbitrary>], iteration_bounds = array<i64: 1>, scalar_prefetch = 0 : i64, scratch_operands = 0 : i64, tpu.core_type = #tpu.core_type<tc>, window_params = [{pipeline_mode = #tpu.pipeline_mode<synchronous>, transform_indices = @transform_0, window_bounds = array<i64: 8, 1024>}, {pipeline_mode = #tpu.pipeline_mode<synchronous>, transform_indices = @transform_1, window_bounds = array<i64: 1024, 512>}, {pipeline_mode = #tpu.pipeline_mode<synchronous>, transform_indices = @transform_2, window_bounds = array<i64: 512, 512>}, {pipeline_mode = #tpu.pipeline_mode<synchronous>, transform_indices = @transform_3, window_bounds = array<i64: 512, 64>}, {pipeline_mode = #tpu.pipeline_mode<synchronous>, transform_indices = @transform_4, window_bounds = array<i64: 5, 512>}, {pipeline_mode = #tpu.pipeline_mode<synchronous>, transform_indices = @transform_5, window_bounds = array<i64: 8, 32>}, {pipeline_mode = #tpu.pipeline_mode<synchronous>, transform_indices = @transform_6, window_bounds = array<i64: 8, 32>}]} {
    %c0 = arith.constant 0 : index
    %c0_0 = arith.constant 0 : index
    %0 = vector.load %arg5[%c0, %c0_0] : memref<5x512xf32, #tpu.memory_space<vmem>>, vector<5x512xf32>
    %1 = vector.extract_strided_slice %0 {offsets = [0, 0], sizes = [1, 512], strides = [1, 1]} : vector<5x512xf32> to vector<1x512xf32>
    %2 = vector.extract_strided_slice %0 {offsets = [1, 0], sizes = [1, 512], strides = [1, 1]} : vector<5x512xf32> to vector<1x512xf32>
    %3 = vector.extract_strided_slice %0 {offsets = [2, 0], sizes = [1, 512], strides = [1, 1]} : vector<5x512xf32> to vector<1x512xf32>
    %4 = vector.extract_strided_slice %0 {offsets = [3, 0], sizes = [1, 512], strides = [1, 1]} : vector<5x512xf32> to vector<1x512xf32>
    %5 = vector.extract_strided_slice %0 {offsets = [4, 0], sizes = [1, 64], strides = [1, 1]} : vector<5x512xf32> to vector<1x64xf32>
    %c0_1 = arith.constant 0 : index
    %c0_2 = arith.constant 0 : index
    %6 = vector.load %arg1[%c0_1, %c0_2] : memref<8x1024xbf16, #tpu.memory_space<vmem>>, vector<8x1024xbf16>
    %c0_3 = arith.constant 0 : index
    %c0_4 = arith.constant 0 : index
    %7 = vector.load %arg2[%c0_3, %c0_4] : memref<1024x512xbf16, #tpu.memory_space<vmem>>, vector<1024x512xbf16>
    %cst = arith.constant dense<0.000000e+00> : vector<8x512xf32>
    %8 = tpu.matmul %6, %7, %cst {dimension_numbers = #tpu.dot_dimension_numbers<[1], [0], [0], [1], [0, 0, 1, 1], [], []>} : vector<8x1024xbf16>, vector<1024x512xbf16>, vector<8x512xf32> -> vector<8x512xf32>
    %9 = vector.broadcast %1 : vector<1x512xf32> to vector<8x512xf32>
    %10 = arith.addf %8, %9 : vector<8x512xf32>
    %cst_5 = arith.constant 0.000000e+00 : f32
    %11 = vector.broadcast %cst_5 : f32 to vector<8x512xf32>
    %12 = arith.cmpf ogt, %10, %11 : vector<8x512xf32>
    %cst_6 = arith.constant 2.000000e-01 : f32
    %13 = vector.broadcast %cst_6 : f32 to vector<8x512xf32>
    %14 = arith.mulf %13, %10 : vector<8x512xf32>
    %15 = arith.select %12, %10, %14 : vector<8x512xi1>, vector<8x512xf32>
    %16 = arith.truncf %15 : vector<8x512xf32> to vector<8x512xbf16>
    %c0_7 = arith.constant 0 : index
    %c0_8 = arith.constant 0 : index
    %17 = vector.load %arg3[%c0_7, %c0_8] : memref<512x512xbf16, #tpu.memory_space<vmem>>, vector<512x512xbf16>
    %cst_9 = arith.constant dense<0.000000e+00> : vector<8x512xf32>
    %18 = tpu.matmul %16, %17, %cst_9 {dimension_numbers = #tpu.dot_dimension_numbers<[1], [0], [0], [1], [0, 0, 1, 1], [], []>} : vector<8x512xbf16>, vector<512x512xbf16>, vector<8x512xf32> -> vector<8x512xf32>
    %19 = vector.broadcast %2 : vector<1x512xf32> to vector<8x512xf32>
    %20 = arith.addf %18, %19 : vector<8x512xf32>
    %cst_10 = arith.constant dense<0.000000e+00> : vector<512xf32>
    %21 = vector.multi_reduction <add>, %20, %cst_10 [0] : vector<8x512xf32> to vector<512xf32>
    %22 = vector.shape_cast %21 : vector<512xf32> to vector<1x512xf32>
    %cst_11 = arith.constant 8.000000e+00 : f32
    %23 = vector.broadcast %cst_11 : f32 to vector<1x512xf32>
    %24 = arith.divf %22, %23 : vector<1x512xf32>
    %25 = vector.broadcast %24 : vector<1x512xf32> to vector<8x512xf32>
    %26 = arith.subf %20, %25 : vector<8x512xf32>
    %27 = vector.broadcast %24 : vector<1x512xf32> to vector<8x512xf32>
    %28 = arith.subf %20, %27 : vector<8x512xf32>
    %29 = arith.mulf %26, %28 : vector<8x512xf32>
    %cst_12 = arith.constant dense<0.000000e+00> : vector<512xf32>
    %30 = vector.multi_reduction <add>, %29, %cst_12 [0] : vector<8x512xf32> to vector<512xf32>
    %31 = vector.shape_cast %30 : vector<512xf32> to vector<1x512xf32>
    %cst_13 = arith.constant 8.000000e+00 : f32
    %32 = vector.broadcast %cst_13 : f32 to vector<1x512xf32>
    %33 = arith.divf %31, %32 : vector<1x512xf32>
    %34 = vector.broadcast %24 : vector<1x512xf32> to vector<8x512xf32>
    %35 = arith.subf %20, %34 : vector<8x512xf32>
    %cst_14 = arith.constant 9.99999974E-6 : f32
    %36 = vector.broadcast %cst_14 : f32 to vector<1x512xf32>
    %37 = arith.addf %33, %36 : vector<1x512xf32>
    %38 = math.rsqrt %37 : vector<1x512xf32>
    %39 = vector.broadcast %38 : vector<1x512xf32> to vector<8x512xf32>
    %40 = arith.mulf %35, %39 : vector<8x512xf32>
    %41 = vector.broadcast %3 : vector<1x512xf32> to vector<8x512xf32>
    %42 = arith.mulf %40, %41 : vector<8x512xf32>
    %43 = vector.broadcast %4 : vector<1x512xf32> to vector<8x512xf32>
    %44 = arith.addf %42, %43 : vector<8x512xf32>
    %cst_15 = arith.constant 0.000000e+00 : f32
    %45 = vector.broadcast %cst_15 : f32 to vector<8x512xf32>
    %46 = arith.cmpf ogt, %44, %45 : vector<8x512xf32>
    %cst_16 = arith.constant 2.000000e-01 : f32
    %47 = vector.broadcast %cst_16 : f32 to vector<8x512xf32>
    %48 = arith.mulf %47, %44 : vector<8x512xf32>
    %49 = arith.select %46, %44, %48 : vector<8x512xi1>, vector<8x512xf32>
    %50 = arith.truncf %49 : vector<8x512xf32> to vector<8x512xbf16>
    %c0_17 = arith.constant 0 : index
    %c0_18 = arith.constant 0 : index
    %51 = vector.load %arg4[%c0_17, %c0_18] : memref<512x64xbf16, #tpu.memory_space<vmem>>, vector<512x64xbf16>
    %cst_19 = arith.constant dense<0.000000e+00> : vector<8x64xf32>
    %52 = tpu.matmul %50, %51, %cst_19 {dimension_numbers = #tpu.dot_dimension_numbers<[1], [0], [0], [1], [0, 0, 1, 1], [], []>} : vector<8x512xbf16>, vector<512x64xbf16>, vector<8x64xf32> -> vector<8x64xf32>
    %53 = vector.broadcast %5 : vector<1x64xf32> to vector<8x64xf32>
    %54 = arith.addf %52, %53 : vector<8x64xf32>
    %55 = vector.extract_strided_slice %54 {offsets = [0, 0], sizes = [8, 32], strides = [1, 1]} : vector<8x64xf32> to vector<8x32xf32>
    %56 = vector.extract_strided_slice %54 {offsets = [0, 32], sizes = [8, 32], strides = [1, 1]} : vector<8x64xf32> to vector<8x32xf32>
    %c0_20 = arith.constant 0 : index
    %c0_21 = arith.constant 0 : index
    %57 = vector.load %arg6[%c0_20, %c0_21] : memref<8x32xf32, #tpu.memory_space<vmem>>, vector<8x32xf32>
    %cst_22 = arith.constant 5.000000e-01 : f32
    %58 = vector.broadcast %cst_22 : f32 to vector<8x32xf32>
    %59 = arith.mulf %56, %58 : vector<8x32xf32>
    %60 = math.exp %59 : vector<8x32xf32>
    %61 = arith.mulf %57, %60 : vector<8x32xf32>
    %62 = arith.addf %61, %55 : vector<8x32xf32>
    %c0_23 = arith.constant 0 : index
    %c0_24 = arith.constant 0 : index
    %63 = vector.load %arg7[%c0_23, %c0_24] : memref<8x32xf32, #tpu.memory_space<vmem>>, vector<8x32xf32>
    tpu.vector_store %arg7[%c0_23, %c0_24], %62 {strides = array<i32>} : memref<8x32xf32, #tpu.memory_space<vmem>>, vector<8x32xf32>,
    return
  }
  func.func @transform_0(%arg0: i32) -> (i32, i32) {
    %c0_i32 = arith.constant 0 : i32
    %c0_i32_0 = arith.constant 0 : i32
    %c0_i32_1 = arith.constant 0 : i32
    return %c0_i32, %c0_i32_0 : i32, i32
  }
  func.func @transform_1(%arg0: i32) -> (i32, i32) {
    %c0_i32 = arith.constant 0 : i32
    %c0_i32_0 = arith.constant 0 : i32
    %c0_i32_1 = arith.constant 0 : i32
    return %c0_i32, %c0_i32_0 : i32, i32
  }
  func.func @transform_2(%arg0: i32) -> (i32, i32) {
    %c0_i32 = arith.constant 0 : i32
    %c0_i32_0 = arith.constant 0 : i32
    %c0_i32_1 = arith.constant 0 : i32
    return %c0_i32, %c0_i32_0 : i32, i32
  }
  func.func @transform_3(%arg0: i32) -> (i32, i32) {
    %c0_i32 = arith.constant 0 : i32
    %c0_i32_0 = arith.constant 0 : i32
    %c0_i32_1 = arith.constant 0 : i32
    return %c0_i32, %c0_i32_0 : i32, i32
  }
  func.func @transform_4(%arg0: i32) -> (i32, i32) {
    %c0_i32 = arith.constant 0 : i32
    %c0_i32_0 = arith.constant 0 : i32
    %c0_i32_1 = arith.constant 0 : i32
    return %c0_i32, %c0_i32_0 : i32, i32
  }
  func.func @transform_5(%arg0: i32) -> (i32, i32) {
    %c0_i32 = arith.constant 0 : i32
    %c0_i32_0 = arith.constant 0 : i32
    %c0_i32_1 = arith.constant 0 : i32
    return %c0_i32, %c0_i32_0 : i32, i32
  }
  func.func @transform_6(%arg0: i32) -> (i32, i32) {
    %c0_i32 = arith.constant 0 : i32
    %c0_i32_0 = arith.constant 0 : i32
    %c0_i32_1 = arith.constant 0 : i32
    return %c0_i32, %c0_i32_0 : i32, i32
  }
}

</mosaic_0001>

<llo_original>
// kernel: tpu_custom_call.1
$region0: #{tpu_custom_call.1}
  #allocation0 [shape = 'u32[]', space=smem, size = 0x4, offset = 0x4, fixed_abs, tag = 'smem constant byte address 0x4 - core index']
  #allocation1 [shape = 'u32[72,128]{1,0:T(1,128)}', space=vmem, size = 0x9000, scoped, tag = 'internal scratch']
  %s0 = inlined_call_operand.vmem [shape: bf16[8,1024], index: 0, kind: input, shape index: {}]
  %s1 = inlined_call_operand.hbm [shape: bf16[1024,512], index: 1, kind: input, shape index: {}]
  %s2 = inlined_call_operand.hbm [shape: bf16[512,512], index: 2, kind: input, shape index: {}]
  %s3 = inlined_call_operand.vmem [shape: bf16[512,64], index: 3, kind: input, shape index: {}]
  %s4 = inlined_call_operand.vmem [shape: f32[5,512], index: 4, kind: input, shape index: {}]
  %s5 = inlined_call_operand.vmem [shape: f32[8,32], index: 5, kind: input, shape index: {}]
  %s6 = inlined_call_operand.hbm [shape: f32[8,32], index: 6, kind: output, shape index: {}]
  %s7 = sld [smem:[#allocation0]]
  $region42: #{tpu_custom_call.1} parent=0
    _
  %s9 = ssub.s32 1, %s7
  %s10 = scalar_select 0, %s9, %s7
  $region1: #{tpu_custom_call.1} parent=0
    #allocation2 [shape = 'u8[1048576]{0}', space=vmem, size = 0x100000, scoped, tag = 'input window, operand 1, single buffered']
    #allocation3 [shape = 's32[1]{0}', space=sflag, size = 0x4, scoped, tag = 'scoped memory for tpu_custom_call.1']
    #allocation4 [shape = 's32[1]{0}', space=sflag, size = 0x4, scoped, tag = 'scoped memory for tpu_custom_call.1']
    #allocation5 [shape = 'u8[524288]{0}', space=vmem, size = 0x80000, scoped, tag = 'input window, operand 2, single buffered']
    #allocation6 [shape = 's32[1]{0}', space=sflag, size = 0x4, scoped, tag = 'scoped memory for tpu_custom_call.1']
    #allocation7 [shape = 'u8[4096]{0}', space=vmem, size = 0x1000, scoped, tag = 'output window, operand 0, single buffered']
    %11 = vsyncpa [#allocation3], 0
    %12 = vsyncpa [#allocation6], 0
    %13 = vsyncpa [#allocation4], 0
    // Predicated region
    $region2: #{tpu_custom_call.1} parent=1 // pred_check
      _
    $region3: #{tpu_custom_call.1} parent=1 // pred_check_branch
      %15 = sbr.rel (0) target = $region5
    $region4: #{tpu_custom_call.1} parent=1 // pred_region
      _
    $region5: #{tpu_custom_call.1} parent=1 // pred_fallthru
      _
    // Predicated region
    $region6: #{tpu_custom_call.1} parent=1 // pred_check
      _
    $region7: #{tpu_custom_call.1} parent=1 // pred_check_branch
      %17 = sbr.rel (0) target = $region9
    $region8: #{tpu_custom_call.1} parent=1 // pred_region
      %19 = vsyncadd [#allocation3], 0
      %s20 = sshll.u32 %s1, 4
      %s21 = int_to_ptr.hbm [resolvable:$true] %s20
      %s22 = sshll.u32 [#allocation2], 4
      %s23 = int_to_ptr.vmem [resolvable:$true] %s22
      %28 = dma.hbm_to_vmem [thread:$0]  %s21, 32768, %s23, [#allocation3], 256, 256, 16
    $region9: #{tpu_custom_call.1} parent=1 // pred_fallthru
      _
    // Predicated region
    $region10: #{tpu_custom_call.1} parent=1 // pred_check
      _
    $region11: #{tpu_custom_call.1} parent=1 // pred_check_branch
      %30 = sbr.rel (0) target = $region13
    $region12: #{tpu_custom_call.1} parent=1 // pred_region
      %32 = vsyncadd [#allocation6], 0
      %s33 = sshll.u32 %s2, 4
      %s34 = int_to_ptr.hbm [resolvable:$true] %s33
      %s35 = sshll.u32 [#allocation5], 4
      %s36 = int_to_ptr.vmem [resolvable:$true] %s35
      %41 = dma.hbm_to_vmem [thread:$0]  %s34, 16384, %s36, [#allocation6], 256, 256, 16
    $region13: #{tpu_custom_call.1} parent=1 // pred_fallthru
      _
    // Predicated region
    $region14: #{tpu_custom_call.1} parent=1 // pred_check
      _
    $region15: #{tpu_custom_call.1} parent=1 // pred_check_branch
      %43 = sbr.rel (0) target = $region17
    $region16: #{tpu_custom_call.1} parent=1 // pred_region
      _
    $region17: #{tpu_custom_call.1} parent=1 // pred_fallthru
      _
    // Predicated region
    $region18: #{tpu_custom_call.1} parent=1 // pred_check
      _
    $region19: #{tpu_custom_call.1} parent=1 // pred_check_branch
      %45 = sbr.rel (0) target = $region21
    $region20: #{tpu_custom_call.1} parent=1 // pred_region
      _
    $region21: #{tpu_custom_call.1} parent=1 // pred_fallthru
      _
    // Predicated region
    $region22: #{tpu_custom_call.1} parent=1 // pred_check
      _
    $region23: #{tpu_custom_call.1} parent=1 // pred_check_branch
      %47 = sbr.rel (0) target = $region25
    $region24: #{tpu_custom_call.1} parent=1 // pred_region
      _
    $region25: #{tpu_custom_call.1} parent=1 // pred_fallthru
      _
    // Predicated region
    $region26: #{tpu_custom_call.1} parent=1 // pred_check
      _
    $region27: #{tpu_custom_call.1} parent=1 // pred_check_branch
      %49 = sbr.rel (0) target = $region29
    $region28: #{tpu_custom_call.1} parent=1 // pred_region
      %51 = dma.done [#allocation3], 32768
    $region29: #{tpu_custom_call.1} parent=1 // pred_fallthru
      _
    // Predicated region
    $region30: #{tpu_custom_call.1} parent=1 // pred_check
      _
    $region31: #{tpu_custom_call.1} parent=1 // pred_check_branch
      %53 = sbr.rel (0) target = $region33
    $region32: #{tpu_custom_call.1} parent=1 // pred_region
      %55 = dma.done [#allocation6], 16384
    $region33: #{tpu_custom_call.1} parent=1 // pred_fallthru
      _
    %v56 = vld [vmem:[%s4] sm:$0x1f]
    %v57 = vld [vmem:[%s4 + $0x8] sm:$0x1f]
    %v58 = vld [vmem:[%s4 + $0x10] sm:$0x1f]
    %v59 = vld [vmem:[%s4 + $0x18] sm:$0x1f]
    %v60 = vld [vmem:[%s0] sm:$0xff]
    %v61 = vld [vmem:[%s0 + $0x8] sm:$0xff]
    %v62 = vld [vmem:[%s0 + $0x10] sm:$0xff]
    %v63 = vld [vmem:[%s0 + $0x18] sm:$0xff]
    %v64 = vld [vmem:[#allocation2] sm:$0xff]
    %v65 = vld [vmem:[#allocation2 + $0x8] sm:$0xff]
    %v66 = vld [vmem:[#allocation2 + $0x10] sm:$0xff]
    %v67 = vld [vmem:[#allocation2 + $0x18] sm:$0xff]
    %v68 = vld [vmem:[#allocation2 + $0x20] sm:$0xff]
    %v69 = vld [vmem:[#allocation2 + $0x28] sm:$0xff]
    %v70 = vld [vmem:[#allocation2 + $0x30] sm:$0xff]
    %v71 = vld [vmem:[#allocation2 + $0x38] sm:$0xff]
    %v72 = vld [vmem:[#allocation2 + $0x40] sm:$0xff]
    %v73 = vld [vmem:[#allocation2 + $0x48] sm:$0xff]
    %v74 = vld [vmem:[#allocation2 + $0x50] sm:$0xff]
    %v75 = vld [vmem:[#allocation2 + $0x58] sm:$0xff]
    %v76 = vld [vmem:[#allocation2 + $0x60] sm:$0xff]
    %v77 = vld [vmem:[#allocation2 + $0x68] sm:$0xff]
    %v78 = vld [vmem:[#allocation2 + $0x70] sm:$0xff]
    %v79 = vld [vmem:[#allocation2 + $0x78] sm:$0xff]
    %v80 = vld [vmem:[#allocation2 + $0x80] sm:$0xff]
    %v81 = vld [vmem:[#allocation2 + $0x88] sm:$0xff]
    %v82 = vld [vmem:[#allocation2 + $0x90] sm:$0xff]
    %v83 = vld [vmem:[#allocation2 + $0x98] sm:$0xff]
    %v84 = vld [vmem:[#allocation2 + $0xa0] sm:$0xff]
    %v85 = vld [vmem:[#allocation2 + $0xa8] sm:$0xff]
    %v86 = vld [vmem:[#allocation2 + $0xb0] sm:$0xff]
    %v87 = vld [vmem:[#allocation2 + $0xb8] sm:$0xff]
    %v88 = vld [vmem:[#allocation2 + $0xc0] sm:$0xff]
    %v89 = vld [vmem:[#allocation2 + $0xc8] sm:$0xff]
    %v90 = vld [vmem:[#allocation2 + $0xd0] sm:$0xff]
    %v91 = vld [vmem:[#allocation2 + $0xd8] sm:$0xff]
    %v92 = vld [vmem:[#allocation2 + $0xe0] sm:$0xff]
    %v93 = vld [vmem:[#allocation2 + $0xe8] sm:$0xff]
    %v94 = vld [vmem:[#allocation2 + $0xf0] sm:$0xff]
    %v95 = vld [vmem:[#allocation2 + $0xf8] sm:$0xff]
    %v96 = vld [vmem:[#allocation2 + $0x100] sm:$0xff]
    %v97 = vld [vmem:[#allocation2 + $0x108] sm:$0xff]
    %v98 = vld [vmem:[#allocation2 + $0x110] sm:$0xff]
    %v99 = vld [vmem:[#allocation2 + $0x118] sm:$0xff]
    %v100 = vld [vmem:[#allocation2 + $0x120] sm:$0xff]
    %v101 = vld [vmem:[#allocation2 + $0x128] sm:$0xff]
    %v102 = vld [vmem:[#allocation2 + $0x130] sm:$0xff]
    %v103 = vld [vmem:[#allocation2 + $0x138] sm:$0xff]
    %v104 = vld [vmem:[#allocation2 + $0x140] sm:$0xff]
    %v105 = vld [vmem:[#allocation2 + $0x148] sm:$0xff]
    %v106 = vld [vmem:[#allocation2 + $0x150] sm:$0xff]
    %v107 = vld [vmem:[#allocation2 + $0x158] sm:$0xff]
    %v108 = vld [vmem:[#allocation2 + $0x160] sm:$0xff]
    %v109 = vld [vmem:[#allocation2 + $0x168] sm:$0xff]
    %v110 = vld [vmem:[#allocation2 + $0x170] sm:$0xff]
    %v111 = vld [vmem:[#allocation2 + $0x178] sm:$0xff]
    %v112 = vld [vmem:[#allocation2 + $0x180] sm:$0xff]
    %v113 = vld [vmem:[#allocation2 + $0x188] sm:$0xff]
    %v114 = vld [vmem:[#allocation2 + $0x190] sm:$0xff]
    %v115 = vld [vmem:[#allocation2 + $0x198] sm:$0xff]
    %v116 = vld [vmem:[#allocation2 + $0x1a0] sm:$0xff]
    %v117 = vld [vmem:[#allocation2 + $0x1a8] sm:$0xff]
    %v118 = vld [vmem:[#allocation2 + $0x1b0] sm:$0xff]
    %v119 = vld [vmem:[#allocation2 + $0x1b8] sm:$0xff]
    %v120 = vld [vmem:[#allocation2 + $0x1c0] sm:$0xff]
    %v121 = vld [vmem:[#allocation2 + $0x1c8] sm:$0xff]
    %v122 = vld [vmem:[#allocation2 + $0x1d0] sm:$0xff]
    %v123 = vld [vmem:[#allocation2 + $0x1d8] sm:$0xff]
    %v124 = vld [vmem:[#allocation2 + $0x1e0] sm:$0xff]
    %v125 = vld [vmem:[#allocation2 + $0x1e8] sm:$0xff]
    %v126 = vld [vmem:[#allocation2 + $0x1f0] sm:$0xff]
    %v127 = vld [vmem:[#allocation2 + $0x1f8] sm:$0xff]
    %v128 = vld [vmem:[#allocation2 + $0x200] sm:$0xff]
    %v129 = vld [vmem:[#allocation2 + $0x208] sm:$0xff]
    %v130 = vld [vmem:[#allocation2 + $0x210] sm:$0xff]
    %v131 = vld [vmem:[#allocation2 + $0x218] sm:$0xff]
    %v132 = vld [vmem:[#allocation2 + $0x220] sm:$0xff]
    %v133 = vld [vmem:[#allocation2 + $0x228] sm:$0xff]
    %v134 = vld [vmem:[#allocation2 + $0x230] sm:$0xff]
    %v135 = vld [vmem:[#allocation2 + $0x238] sm:$0xff]
    %v136 = vld [vmem:[#allocation2 + $0x240] sm:$0xff]
    %v137 = vld [vmem:[#allocation2 + $0x248] sm:$0xff]
    %v138 = vld [vmem:[#allocation2 + $0x250] sm:$0xff]
    %v139 = vld [vmem:[#allocation2 + $0x258] sm:$0xff]
    %v140 = vld [vmem:[#allocation2 + $0x260] sm:$0xff]
    %v141 = vld [vmem:[#allocation2 + $0x268] sm:$0xff]
    %v142 = vld [vmem:[#allocation2 + $0x270] sm:$0xff]
    %v143 = vld [vmem:[#allocation2 + $0x278] sm:$0xff]
    %v144 = vld [vmem:[#allocation2 + $0x280] sm:$0xff]
    %v145 = vld [vmem:[#allocation2 + $0x288] sm:$0xff]
    %v146 = vld [vmem:[#allocation2 + $0x290] sm:$0xff]
    %v147 = vld [vmem:[#allocation2 + $0x298] sm:$0xff]
    %v148 = vld [vmem:[#allocation2 + $0x2a0] sm:$0xff]
    %v149 = vld [vmem:[#allocation2 + $0x2a8] sm:$0xff]
    %v150 = vld [vmem:[#allocation2 + $0x2b0] sm:$0xff]
    %v151 = vld [vmem:[#allocation2 + $0x2b8] sm:$0xff]
    %v152 = vld [vmem:[#allocation2 + $0x2c0] sm:$0xff]
    %v153 = vld [vmem:[#allocation2 + $0x2c8] sm:$0xff]
    %v154 = vld [vmem:[#allocation2 + $0x2d0] sm:$0xff]
    %v155 = vld [vmem:[#allocation2 + $0x2d8] sm:$0xff]
    %v156 = vld [vmem:[#allocation2 + $0x2e0] sm:$0xff]
    %v157 = vld [vmem:[#allocation2 + $0x2e8] sm:$0xff]
    %v158 = vld [vmem:[#allocation2 + $0x2f0] sm:$0xff]
    %v159 = vld [vmem:[#allocation2 + $0x2f8] sm:$0xff]
    %v160 = vld [vmem:[#allocation2 + $0x300] sm:$0xff]
    %v161 = vld [vmem:[#allocation2 + $0x308] sm:$0xff]
    %v162 = vld [vmem:[#allocation2 + $0x310] sm:$0xff]
    %v163 = vld [vmem:[#allocation2 + $0x318] sm:$0xff]
    %v164 = vld [vmem:[#allocation2 + $0x320] sm:$0xff]
    %v165 = vld [vmem:[#allocation2 + $0x328] sm:$0xff]
    %v166 = vld [vmem:[#allocation2 + $0x330] sm:$0xff]
    %v167 = vld [vmem:[#allocation2 + $0x338] sm:$0xff]
    %v168 = vld [vmem:[#allocation2 + $0x340] sm:$0xff]
    %v169 = vld [vmem:[#allocation2 + $0x348] sm:$0xff]
    %v170 = vld [vmem:[#allocation2 + $0x350] sm:$0xff]
    %v171 = vld [vmem:[#allocation2 + $0x358] sm:$0xff]
    %v172 = vld [vmem:[#allocation2 + $0x360] sm:$0xff]
    %v173 = vld [vmem:[#allocation2 + $0x368] sm:$0xff]
    %v174 = vld [vmem:[#allocation2 + $0x370] sm:$0xff]
    %v175 = vld [vmem:[#allocation2 + $0x378] sm:$0xff]
    %v176 = vld [vmem:[#allocation2 + $0x380] sm:$0xff]
    %v177 = vld [vmem:[#allocation2 + $0x388] sm:$0xff]
    %v178 = vld [vmem:[#allocation2 + $0x390] sm:$0xff]
    %v179 = vld [vmem:[#allocation2 + $0x398] sm:$0xff]
    %v180 = vld [vmem:[#allocation2 + $0x3a0] sm:$0xff]
    %v181 = vld [vmem:[#allocation2 + $0x3a8] sm:$0xff]
    %v182 = vld [vmem:[#allocation2 + $0x3b0] sm:$0xff]
    %v183 = vld [vmem:[#allocation2 + $0x3b8] sm:$0xff]
    %v184 = vld [vmem:[#allocation2 + $0x3c0] sm:$0xff]
    %v185 = vld [vmem:[#allocation2 + $0x3c8] sm:$0xff]
    %v186 = vld [vmem:[#allocation2 + $0x3d0] sm:$0xff]
    %v187 = vld [vmem:[#allocation2 + $0x3d8] sm:$0xff]
    %v188 = vld [vmem:[#allocation2 + $0x3e0] sm:$0xff]
    %v189 = vld [vmem:[#allocation2 + $0x3e8] sm:$0xff]
    %v190 = vld [vmem:[#allocation2 + $0x3f0] sm:$0xff]
    %v191 = vld [vmem:[#allocation2 + $0x3f8] sm:$0xff]
    %v192 = vld [vmem:[#allocation2 + $0x400] sm:$0xff]
    %v193 = vld [vmem:[#allocation2 + $0x408] sm:$0xff]
    %v194 = vld [vmem:[#allocation2 + $0x410] sm:$0xff]
    %v195 = vld [vmem:[#allocation2 + $0x418] sm:$0xff]
    %v196 = vld [vmem:[#allocation2 + $0x420] sm:$0xff]
    %v197 = vld [vmem:[#allocation2 + $0x428] sm:$0xff]
    %v198 = vld [vmem:[#allocation2 + $0x430] sm:$0xff]
    %v199 = vld [vmem:[#allocation2 + $0x438] sm:$0xff]
    %v200 = vld [vmem:[#allocation2 + $0x440] sm:$0xff]
    %v201 = vld [vmem:[#allocation2 + $0x448] sm:$0xff]
    %v202 = vld [vmem:[#allocation2 + $0x450] sm:$0xff]
    %v203 = vld [vmem:[#allocation2 + $0x458] sm:$0xff]
    %v204 = vld [vmem:[#allocation2 + $0x460] sm:$0xff]
    %v205 = vld [vmem:[#allocation2 + $0x468] sm:$0xff]
    %v206 = vld [vmem:[#allocation2 + $0x470] sm:$0xff]
    %v207 = vld [vmem:[#allocation2 + $0x478] sm:$0xff]
    %v208 = vld [vmem:[#allocation2 + $0x480] sm:$0xff]
    %v209 = vld [vmem:[#allocation2 + $0x488] sm:$0xff]
    %v210 = vld [vmem:[#allocation2 + $0x490] sm:$0xff]
    %v211 = vld [vmem:[#allocation2 + $0x498] sm:$0xff]
    %v212 = vld [vmem:[#allocation2 + $0x4a0] sm:$0xff]
    %v213 = vld [vmem:[#allocation2 + $0x4a8] sm:$0xff]
    %v214 = vld [vmem:[#allocation2 + $0x4b0] sm:$0xff]
    %v215 = vld [vmem:[#allocation2 + $0x4b8] sm:$0xff]
    %v216 = vld [vmem:[#allocation2 + $0x4c0] sm:$0xff]
    %v217 = vld [vmem:[#allocation2 + $0x4c8] sm:$0xff]
    %v218 = vld [vmem:[#allocation2 + $0x4d0] sm:$0xff]
    %v219 = vld [vmem:[#allocation2 + $0x4d8] sm:$0xff]
    %v220 = vld [vmem:[#allocation2 + $0x4e0] sm:$0xff]
    %v221 = vld [vmem:[#allocation2 + $0x4e8] sm:$0xff]
    %v222 = vld [vmem:[#allocation2 + $0x4f0] sm:$0xff]
    %v223 = vld [vmem:[#allocation2 + $0x4f8] sm:$0xff]
    %v224 = vld [vmem:[#allocation2 + $0x500] sm:$0xff]
    %v225 = vld [vmem:[#allocation2 + $0x508] sm:$0xff]
    %v226 = vld [vmem:[#allocation2 + $0x510] sm:$0xff]
    %v227 = vld [vmem:[#allocation2 + $0x518] sm:$0xff]
    %v228 = vld [vmem:[#allocation2 + $0x520] sm:$0xff]
    %v229 = vld [vmem:[#allocation2 + $0x528] sm:$0xff]
    %v230 = vld [vmem:[#allocation2 + $0x530] sm:$0xff]
    %v231 = vld [vmem:[#allocation2 + $0x538] sm:$0xff]
    %v232 = vld [vmem:[#allocation2 + $0x540] sm:$0xff]
    %v233 = vld [vmem:[#allocation2 + $0x548] sm:$0xff]
    %v234 = vld [vmem:[#allocation2 + $0x550] sm:$0xff]
    %v235 = vld [vmem:[#allocation2 + $0x558] sm:$0xff]
    %v236 = vld [vmem:[#allocation2 + $0x560] sm:$0xff]
    %v237 = vld [vmem:[#allocation2 + $0x568] sm:$0xff]
    %v238 = vld [vmem:[#allocation2 + $0x570] sm:$0xff]
    %v239 = vld [vmem:[#allocation2 + $0x578] sm:$0xff]
    %v240 = vld [vmem:[#allocation2 + $0x580] sm:$0xff]
    %v241 = vld [vmem:[#allocation2 + $0x588] sm:$0xff]
    %v242 = vld [vmem:[#allocation2 + $0x590] sm:$0xff]
    %v243 = vld [vmem:[#allocation2 + $0x598] sm:$0xff]
    %v244 = vld [vmem:[#allocation2 + $0x5a0] sm:$0xff]
    %v245 = vld [vmem:[#allocation2 + $0x5a8] sm:$0xff]
    %v246 = vld [vmem:[#allocation2 + $0x5b0] sm:$0xff]
    %v247 = vld [vmem:[#allocation2 + $0x5b8] sm:$0xff]
    %v248 = vld [vmem:[#allocation2 + $0x5c0] sm:$0xff]
    %v249 = vld [vmem:[#allocation2 + $0x5c8] sm:$0xff]
    %v250 = vld [vmem:[#allocation2 + $0x5d0] sm:$0xff]
    %v251 = vld [vmem:[#allocation2 + $0x5d8] sm:$0xff]
    %v252 = vld [vmem:[#allocation2 + $0x5e0] sm:$0xff]
    %v253 = vld [vmem:[#allocation2 + $0x5e8] sm:$0xff]
    %v254 = vld [vmem:[#allocation2 + $0x5f0] sm:$0xff]
    %v255 = vld [vmem:[#allocation2 + $0x5f8] sm:$0xff]
    %v256 = vld [vmem:[#allocation2 + $0x600] sm:$0xff]
    %v257 = vld [vmem:[#allocation2 + $0x608] sm:$0xff]
    %v258 = vld [vmem:[#allocation2 + $0x610] sm:$0xff]
    %v259 = vld [vmem:[#allocation2 + $0x618] sm:$0xff]
    %v260 = vld [vmem:[#allocation2 + $0x620] sm:$0xff]
    %v261 = vld [vmem:[#allocation2 + $0x628] sm:$0xff]
    %v262 = vld [vmem:[#allocation2 + $0x630] sm:$0xff]
    %v263 = vld [vmem:[#allocation2 + $0x638] sm:$0xff]
    %v264 = vld [vmem:[#allocation2 + $0x640] sm:$0xff]
    %v265 = vld [vmem:[#allocation2 + $0x648] sm:$0xff]
    %v266 = vld [vmem:[#allocation2 + $0x650] sm:$0xff]
    %v267 = vld [vmem:[#allocation2 + $0x658] sm:$0xff]
    %v268 = vld [vmem:[#allocation2 + $0x660] sm:$0xff]
    %v269 = vld [vmem:[#allocation2 + $0x668] sm:$0xff]
    %v270 = vld [vmem:[#allocation2 + $0x670] sm:$0xff]
    %v271 = vld [vmem:[#allocation2 + $0x678] sm:$0xff]
    %v272 = vld [vmem:[#allocation2 + $0x680] sm:$0xff]
    %v273 = vld [vmem:[#allocation2 + $0x688] sm:$0xff]
    %v274 = vld [vmem:[#allocation2 + $0x690] sm:$0xff]
    %v275 = vld [vmem:[#allocation2 + $0x698] sm:$0xff]
    %v276 = vld [vmem:[#allocation2 + $0x6a0] sm:$0xff]
    %v277 = vld [vmem:[#allocation2 + $0x6a8] sm:$0xff]
    %v278 = vld [vmem:[#allocation2 + $0x6b0] sm:$0xff]
    %v279 = vld [vmem:[#allocation2 + $0x6b8] sm:$0xff]
    %v280 = vld [vmem:[#allocation2 + $0x6c0] sm:$0xff]
    %v281 = vld [vmem:[#allocation2 + $0x6c8] sm:$0xff]
    %v282 = vld [vmem:[#allocation2 + $0x6d0] sm:$0xff]
    %v283 = vld [vmem:[#allocation2 + $0x6d8] sm:$0xff]
    %v284 = vld [vmem:[#allocation2 + $0x6e0] sm:$0xff]
    %v285 = vld [vmem:[#allocation2 + $0x6e8] sm:$0xff]
    %v286 = vld [vmem:[#allocation2 + $0x6f0] sm:$0xff]
    %v287 = vld [vmem:[#allocation2 + $0x6f8] sm:$0xff]
    %v288 = vld [vmem:[#allocation2 + $0x700] sm:$0xff]
    %v289 = vld [vmem:[#allocation2 + $0x708] sm:$0xff]
    %v290 = vld [vmem:[#allocation2 + $0x710] sm:$0xff]
    %v291 = vld [vmem:[#allocation2 + $0x718] sm:$0xff]
    %v292 = vld [vmem:[#allocation2 + $0x720] sm:$0xff]
    %v293 = vld [vmem:[#allocation2 + $0x728] sm:$0xff]
    %v294 = vld [vmem:[#allocation2 + $0x730] sm:$0xff]
    %v295 = vld [vmem:[#allocation2 + $0x738] sm:$0xff]
    %v296 = vld [vmem:[#allocation2 + $0x740] sm:$0xff]
    %v297 = vld [vmem:[#allocation2 + $0x748] sm:$0xff]
    %v298 = vld [vmem:[#allocation2 + $0x750] sm:$0xff]
    %v299 = vld [vmem:[#allocation2 + $0x758] sm:$0xff]
    %v300 = vld [vmem:[#allocation2 + $0x760] sm:$0xff]
    %v301 = vld [vmem:[#allocation2 + $0x768] sm:$0xff]
    %v302 = vld [vmem:[#allocation2 + $0x770] sm:$0xff]
    %v303 = vld [vmem:[#allocation2 + $0x778] sm:$0xff]
    %v304 = vld [vmem:[#allocation2 + $0x780] sm:$0xff]
    %v305 = vld [vmem:[#allocation2 + $0x788] sm:$0xff]
    %v306 = vld [vmem:[#allocation2 + $0x790] sm:$0xff]
    %v307 = vld [vmem:[#allocation2 + $0x798] sm:$0xff]
    %v308 = vld [vmem:[#allocation2 + $0x7a0] sm:$0xff]
    %v309 = vld [vmem:[#allocation2 + $0x7a8] sm:$0xff]
    %v310 = vld [vmem:[#allocation2 + $0x7b0] sm:$0xff]
    %v311 = vld [vmem:[#allocation2 + $0x7b8] sm:$0xff]
    %v312 = vld [vmem:[#allocation2 + $0x7c0] sm:$0xff]
    %v313 = vld [vmem:[#allocation2 + $0x7c8] sm:$0xff]
    %v314 = vld [vmem:[#allocation2 + $0x7d0] sm:$0xff]
    %v315 = vld [vmem:[#allocation2 + $0x7d8] sm:$0xff]
    %v316 = vld [vmem:[#allocation2 + $0x7e0] sm:$0xff]
    %v317 = vld [vmem:[#allocation2 + $0x7e8] sm:$0xff]
    %v318 = vld [vmem:[#allocation2 + $0x7f0] sm:$0xff]
    %v319 = vld [vmem:[#allocation2 + $0x7f8] sm:$0xff]
    %v320 = vperm.slane %v56, 0
    %v321 = vperm.slane %v57, 0
    %v322 = vperm.slane %v58, 0
    %v323 = vperm.slane %v59, 0
    %v328 = vunpack.c.l.b16 %v60
    %v329 = vunpack.c.h.b16 %v60
    %v330 = vunpack.c.l.b16 %v61
    %v331 = vunpack.c.h.b16 %v61
    %v332 = vunpack.c.l.b16 %v62
    %v333 = vunpack.c.h.b16 %v62
    %v334 = vunpack.c.l.b16 %v63
    %v335 = vunpack.c.h.b16 %v63
    %v336 = vpack.c.b16 %v328, %v328
    %v337 = vpack.c.b16 %v329, %v329
    %v338 = vpack.c.b16 %v330, %v330
    %v339 = vpack.c.b16 %v331, %v331
    %v340 = vpack.c.b16 %v332, %v332
    %v341 = vpack.c.b16 %v333, %v333
    %v342 = vpack.c.b16 %v334, %v334
    %v343 = vpack.c.b16 %v335, %v335
    %v608 = vunpack.c.l.b16 %v64
    %v609 = vunpack.c.h.b16 %v64
    %v610 = vunpack.c.l.b16 %v65
    %v611 = vunpack.c.h.b16 %v65
    %v612 = vunpack.c.l.b16 %v66
    %v613 = vunpack.c.h.b16 %v66
    %v614 = vunpack.c.l.b16 %v67
    %v615 = vunpack.c.h.b16 %v67
    %v616 = vunpack.c.l.b16 %v68
    %v617 = vunpack.c.h.b16 %v68
    %v618 = vunpack.c.l.b16 %v69
    %v619 = vunpack.c.h.b16 %v69
    %v620 = vunpack.c.l.b16 %v70
    %v621 = vunpack.c.h.b16 %v70
    %v622 = vunpack.c.l.b16 %v71
    %v623 = vunpack.c.h.b16 %v71
    %v624 = vunpack.c.l.b16 %v72
    %v625 = vunpack.c.h.b16 %v72
    %v626 = vunpack.c.l.b16 %v73
    %v627 = vunpack.c.h.b16 %v73
    %v628 = vunpack.c.l.b16 %v74
    %v629 = vunpack.c.h.b16 %v74
    %v630 = vunpack.c.l.b16 %v75
    %v631 = vunpack.c.h.b16 %v75
    %v632 = vunpack.c.l.b16 %v76
    %v633 = vunpack.c.h.b16 %v76
    %v634 = vunpack.c.l.b16 %v77
    %v635 = vunpack.c.h.b16 %v77
    %v636 = vunpack.c.l.b16 %v78
    %v637 = vunpack.c.h.b16 %v78
    %v638 = vunpack.c.l.b16 %v79
    %v639 = vunpack.c.h.b16 %v79
    %v640 = vunpack.c.l.b16 %v80
    %v641 = vunpack.c.h.b16 %v80
    %v642 = vunpack.c.l.b16 %v81
    %v643 = vunpack.c.h.b16 %v81
    %v644 = vunpack.c.l.b16 %v82
    %v645 = vunpack.c.h.b16 %v82
    %v646 = vunpack.c.l.b16 %v83
    %v647 = vunpack.c.h.b16 %v83
    %v648 = vunpack.c.l.b16 %v84
    %v649 = vunpack.c.h.b16 %v84
    %v650 = vunpack.c.l.b16 %v85
    %v651 = vunpack.c.h.b16 %v85
    %v652 = vunpack.c.l.b16 %v86
    %v653 = vunpack.c.h.b16 %v86
    %v654 = vunpack.c.l.b16 %v87
    %v655 = vunpack.c.h.b16 %v87
    %v656 = vunpack.c.l.b16 %v88
    %v657 = vunpack.c.h.b16 %v88
    %v658 = vunpack.c.l.b16 %v89
    %v659 = vunpack.c.h.b16 %v89
    %v660 = vunpack.c.l.b16 %v90
    %v661 = vunpack.c.h.b16 %v90
    %v662 = vunpack.c.l.b16 %v91
    %v663 = vunpack.c.h.b16 %v91
    %v664 = vunpack.c.l.b16 %v92
    %v665 = vunpack.c.h.b16 %v92
    %v666 = vunpack.c.l.b16 %v93
    %v667 = vunpack.c.h.b16 %v93
    %v668 = vunpack.c.l.b16 %v94
    %v669 = vunpack.c.h.b16 %v94
    %v670 = vunpack.c.l.b16 %v95
    %v671 = vunpack.c.h.b16 %v95
    %v672 = vunpack.c.l.b16 %v96
    %v673 = vunpack.c.h.b16 %v96
    %v674 = vunpack.c.l.b16 %v97
    %v675 = vunpack.c.h.b16 %v97
    %v676 = vunpack.c.l.b16 %v98
    %v677 = vunpack.c.h.b16 %v98
    %v678 = vunpack.c.l.b16 %v99
    %v679 = vunpack.c.h.b16 %v99
    %v680 = vunpack.c.l.b16 %v100
    %v681 = vunpack.c.h.b16 %v100
    %v682 = vunpack.c.l.b16 %v101
    %v683 = vunpack.c.h.b16 %v101
    %v684 = vunpack.c.l.b16 %v102
    %v685 = vunpack.c.h.b16 %v102
    %v686 = vunpack.c.l.b16 %v103
    %v687 = vunpack.c.h.b16 %v103
    %v688 = vunpack.c.l.b16 %v104
    %v689 = vunpack.c.h.b16 %v104
    %v690 = vunpack.c.l.b16 %v105
    %v691 = vunpack.c.h.b16 %v105
    %v692 = vunpack.c.l.b16 %v106
    %v693 = vunpack.c.h.b16 %v106
    %v694 = vunpack.c.l.b16 %v107
    %v695 = vunpack.c.h.b16 %v107
    %v696 = vunpack.c.l.b16 %v108
    %v697 = vunpack.c.h.b16 %v108
    %v698 = vunpack.c.l.b16 %v109
    %v699 = vunpack.c.h.b16 %v109
    %v700 = vunpack.c.l.b16 %v110
    %v701 = vunpack.c.h.b16 %v110
    %v702 = vunpack.c.l.b16 %v111
    %v703 = vunpack.c.h.b16 %v111
    %v704 = vunpack.c.l.b16 %v112
    %v705 = vunpack.c.h.b16 %v112
    %v706 = vunpack.c.l.b16 %v113
    %v707 = vunpack.c.h.b16 %v113
    %v708 = vunpack.c.l.b16 %v114
    %v709 = vunpack.c.h.b16 %v114
    %v710 = vunpack.c.l.b16 %v115
    %v711 = vunpack.c.h.b16 %v115
    %v712 = vunpack.c.l.b16 %v116
    %v713 = vunpack.c.h.b16 %v116
    %v714 = vunpack.c.l.b16 %v117
    %v715 = vunpack.c.h.b16 %v117
    %v716 = vunpack.c.l.b16 %v118
    %v717 = vunpack.c.h.b16 %v118
    %v718 = vunpack.c.l.b16 %v119
    %v719 = vunpack.c.h.b16 %v119
    %v720 = vunpack.c.l.b16 %v120
    %v721 = vunpack.c.h.b16 %v120
    %v722 = vunpack.c.l.b16 %v121
    %v723 = vunpack.c.h.b16 %v121
    %v724 = vunpack.c.l.b16 %v122
    %v725 = vunpack.c.h.b16 %v122
    %v726 = vunpack.c.l.b16 %v123
    %v727 = vunpack.c.h.b16 %v123
    %v728 = vunpack.c.l.b16 %v124
    %v729 = vunpack.c.h.b16 %v124
    %v730 = vunpack.c.l.b16 %v125
    %v731 = vunpack.c.h.b16 %v125
    %v732 = vunpack.c.l.b16 %v126
    %v733 = vunpack.c.h.b16 %v126
    %v734 = vunpack.c.l.b16 %v127
    %v735 = vunpack.c.h.b16 %v127
    %v736 = vunpack.c.l.b16 %v128
    %v737 = vunpack.c.h.b16 %v128
    %v738 = vunpack.c.l.b16 %v129
    %v739 = vunpack.c.h.b16 %v129
    %v740 = vunpack.c.l.b16 %v130
    %v741 = vunpack.c.h.b16 %v130
    %v742 = vunpack.c.l.b16 %v131
    %v743 = vunpack.c.h.b16 %v131
    %v744 = vunpack.c.l.b16 %v132
    %v745 = vunpack.c.h.b16 %v132
    %v746 = vunpack.c.l.b16 %v133
    %v747 = vunpack.c.h.b16 %v133
    %v748 = vunpack.c.l.b16 %v134
    %v749 = vunpack.c.h.b16 %v134
    %v750 = vunpack.c.l.b16 %v135
    %v751 = vunpack.c.h.b16 %v135
    %v752 = vunpack.c.l.b16 %v136
    %v753 = vunpack.c.h.b16 %v136
    %v754 = vunpack.c.l.b16 %v137
    %v755 = vunpack.c.h.b16 %v137
    %v756 = vunpack.c.l.b16 %v138
    %v757 = vunpack.c.h.b16 %v138
    %v758 = vunpack.c.l.b16 %v139
    %v759 = vunpack.c.h.b16 %v139
    %v760 = vunpack.c.l.b16 %v140
    %v761 = vunpack.c.h.b16 %v140
    %v762 = vunpack.c.l.b16 %v141
    %v763 = vunpack.c.h.b16 %v141
    %v764 = vunpack.c.l.b16 %v142
    %v765 = vunpack.c.h.b16 %v142
    %v766 = vunpack.c.l.b16 %v143
    %v767 = vunpack.c.h.b16 %v143
    %v768 = vunpack.c.l.b16 %v144
    %v769 = vunpack.c.h.b16 %v144
    %v770 = vunpack.c.l.b16 %v145
    %v771 = vunpack.c.h.b16 %v145
    %v772 = vunpack.c.l.b16 %v146
    %v773 = vunpack.c.h.b16 %v146
    %v774 = vunpack.c.l.b16 %v147
    %v775 = vunpack.c.h.b16 %v147
    %v776 = vunpack.c.l.b16 %v148
    %v777 = vunpack.c.h.b16 %v148
    %v778 = vunpack.c.l.b16 %v149
    %v779 = vunpack.c.h.b16 %v149
    %v780 = vunpack.c.l.b16 %v150
    %v781 = vunpack.c.h.b16 %v150
    %v782 = vunpack.c.l.b16 %v151
    %v783 = vunpack.c.h.b16 %v151
    %v784 = vunpack.c.l.b16 %v152
    %v785 = vunpack.c.h.b16 %v152
    %v786 = vunpack.c.l.b16 %v153
    %v787 = vunpack.c.h.b16 %v153
    %v788 = vunpack.c.l.b16 %v154
    %v789 = vunpack.c.h.b16 %v154
    %v790 = vunpack.c.l.b16 %v155
    %v791 = vunpack.c.h.b16 %v155
    %v792 = vunpack.c.l.b16 %v156
    %v793 = vunpack.c.h.b16 %v156
    %v794 = vunpack.c.l.b16 %v157
    %v795 = vunpack.c.h.b16 %v157
    %v796 = vunpack.c.l.b16 %v158
    %v797 = vunpack.c.h.b16 %v158
    %v798 = vunpack.c.l.b16 %v159
    %v799 = vunpack.c.h.b16 %v159
    %v800 = vunpack.c.l.b16 %v160
    %v801 = vunpack.c.h.b16 %v160
    %v802 = vunpack.c.l.b16 %v161
    %v803 = vunpack.c.h.b16 %v161
    %v804 = vunpack.c.l.b16 %v162
    %v805 = vunpack.c.h.b16 %v162
    %v806 = vunpack.c.l.b16 %v163
    %v807 = vunpack.c.h.b16 %v163
    %v808 = vunpack.c.l.b16 %v164
    %v809 = vunpack.c.h.b16 %v164
    %v810 = vunpack.c.l.b16 %v165
    %v811 = vunpack.c.h.b16 %v165
    %v812 = vunpack.c.l.b16 %v166
    %v813 = vunpack.c.h.b16 %v166
    %v814 = vunpack.c.l.b16 %v167
    %v815 = vunpack.c.h.b16 %v167
    %v816 = vunpack.c.l.b16 %v168
    %v817 = vunpack.c.h.b16 %v168
    %v818 = vunpack.c.l.b16 %v169
    %v819 = vunpack.c.h.b16 %v169
    %v820 = vunpack.c.l.b16 %v170
    %v821 = vunpack.c.h.b16 %v170
    %v822 = vunpack.c.l.b16 %v171
    %v823 = vunpack.c.h.b16 %v171
    %v824 = vunpack.c.l.b16 %v172
    %v825 = vunpack.c.h.b16 %v172
    %v826 = vunpack.c.l.b16 %v173
    %v827 = vunpack.c.h.b16 %v173
    %v828 = vunpack.c.l.b16 %v174
    %v829 = vunpack.c.h.b16 %v174
    %v830 = vunpack.c.l.b16 %v175
    %v831 = vunpack.c.h.b16 %v175
    %v832 = vunpack.c.l.b16 %v176
    %v833 = vunpack.c.h.b16 %v176
    %v834 = vunpack.c.l.b16 %v177
    %v835 = vunpack.c.h.b16 %v177
    %v836 = vunpack.c.l.b16 %v178
    %v837 = vunpack.c.h.b16 %v178
    %v838 = vunpack.c.l.b16 %v179
    %v839 = vunpack.c.h.b16 %v179
    %v840 = vunpack.c.l.b16 %v180
    %v841 = vunpack.c.h.b16 %v180
    %v842 = vunpack.c.l.b16 %v181
    %v843 = vunpack.c.h.b16 %v181
    %v844 = vunpack.c.l.b16 %v182
    %v845 = vunpack.c.h.b16 %v182
    %v846 = vunpack.c.l.b16 %v183
    %v847 = vunpack.c.h.b16 %v183
    %v848 = vunpack.c.l.b16 %v184
    %v849 = vunpack.c.h.b16 %v184
    %v850 = vunpack.c.l.b16 %v185
    %v851 = vunpack.c.h.b16 %v185
    %v852 = vunpack.c.l.b16 %v186
    %v853 = vunpack.c.h.b16 %v186
    %v854 = vunpack.c.l.b16 %v187
    %v855 = vunpack.c.h.b16 %v187
    %v856 = vunpack.c.l.b16 %v188
    %v857 = vunpack.c.h.b16 %v188
    %v858 = vunpack.c.l.b16 %v189
    %v859 = vunpack.c.h.b16 %v189
    %v860 = vunpack.c.l.b16 %v190
    %v861 = vunpack.c.h.b16 %v190
    %v862 = vunpack.c.l.b16 %v191
    %v863 = vunpack.c.h.b16 %v191
    %v864 = vunpack.c.l.b16 %v192
    %v865 = vunpack.c.h.b16 %v192
    %v866 = vunpack.c.l.b16 %v193
    %v867 = vunpack.c.h.b16 %v193
    %v868 = vunpack.c.l.b16 %v194
    %v869 = vunpack.c.h.b16 %v194
    %v870 = vunpack.c.l.b16 %v195
    %v871 = vunpack.c.h.b16 %v195
    %v872 = vunpack.c.l.b16 %v196
    %v873 = vunpack.c.h.b16 %v196
    %v874 = vunpack.c.l.b16 %v197
    %v875 = vunpack.c.h.b16 %v197
    %v876 = vunpack.c.l.b16 %v198
    %v877 = vunpack.c.h.b16 %v198
    %v878 = vunpack.c.l.b16 %v199
    %v879 = vunpack.c.h.b16 %v199
    %v880 = vunpack.c.l.b16 %v200
    %v881 = vunpack.c.h.b16 %v200
    %v882 = vunpack.c.l.b16 %v201
    %v883 = vunpack.c.h.b16 %v201
    %v884 = vunpack.c.l.b16 %v202
    %v885 = vunpack.c.h.b16 %v202
    %v886 = vunpack.c.l.b16 %v203
    %v887 = vunpack.c.h.b16 %v203
    %v888 = vunpack.c.l.b16 %v204
    %v889 = vunpack.c.h.b16 %v204
    %v890 = vunpack.c.l.b16 %v205
    %v891 = vunpack.c.h.b16 %v205
    %v892 = vunpack.c.l.b16 %v206
    %v893 = vunpack.c.h.b16 %v206
    %v894 = vunpack.c.l.b16 %v207
    %v895 = vunpack.c.h.b16 %v207
    %v896 = vunpack.c.l.b16 %v208
    %v897 = vunpack.c.h.b16 %v208
    %v898 = vunpack.c.l.b16 %v209
    %v899 = vunpack.c.h.b16 %v209
    %v900 = vunpack.c.l.b16 %v210
    %v901 = vunpack.c.h.b16 %v210
    %v902 = vunpack.c.l.b16 %v211
    %v903 = vunpack.c.h.b16 %v211
    %v904 = vunpack.c.l.b16 %v212
    %v905 = vunpack.c.h.b16 %v212
    %v906 = vunpack.c.l.b16 %v213
    %v907 = vunpack.c.h.b16 %v213
    %v908 = vunpack.c.l.b16 %v214
    %v909 = vunpack.c.h.b16 %v214
    %v910 = vunpack.c.l.b16 %v215
    %v911 = vunpack.c.h.b16 %v215
    %v912 = vunpack.c.l.b16 %v216
    %v913 = vunpack.c.h.b16 %v216
    %v914 = vunpack.c.l.b16 %v217
    %v915 = vunpack.c.h.b16 %v217
    %v916 = vunpack.c.l.b16 %v218
    %v917 = vunpack.c.h.b16 %v218
    %v918 = vunpack.c.l.b16 %v219
    %v919 = vunpack.c.h.b16 %v219
    %v920 = vunpack.c.l.b16 %v220
    %v921 = vunpack.c.h.b16 %v220
    %v922 = vunpack.c.l.b16 %v221
    %v923 = vunpack.c.h.b16 %v221
    %v924 = vunpack.c.l.b16 %v222
    %v925 = vunpack.c.h.b16 %v222
    %v926 = vunpack.c.l.b16 %v223
    %v927 = vunpack.c.h.b16 %v223
    %v928 = vunpack.c.l.b16 %v224
    %v929 = vunpack.c.h.b16 %v224
    %v930 = vunpack.c.l.b16 %v225
    %v931 = vunpack.c.h.b16 %v225
    %v932 = vunpack.c.l.b16 %v226
    %v933 = vunpack.c.h.b16 %v226
    %v934 = vunpack.c.l.b16 %v227
    %v935 = vunpack.c.h.b16 %v227
    %v936 = vunpack.c.l.b16 %v228
    %v937 = vunpack.c.h.b16 %v228
    %v938 = vunpack.c.l.b16 %v229
    %v939 = vunpack.c.h.b16 %v229
    %v940 = vunpack.c.l.b16 %v230
    %v941 = vunpack.c.h.b16 %v230
    %v942 = vunpack.c.l.b16 %v231
    %v943 = vunpack.c.h.b16 %v231
    %v944 = vunpack.c.l.b16 %v232
    %v945 = vunpack.c.h.b16 %v232
    %v946 = vunpack.c.l.b16 %v233
    %v947 = vunpack.c.h.b16 %v233
    %v948 = vunpack.c.l.b16 %v234
    %v949 = vunpack.c.h.b16 %v234
    %v950 = vunpack.c.l.b16 %v235
    %v951 = vunpack.c.h.b16 %v235
    %v952 = vunpack.c.l.b16 %v236
    %v953 = vunpack.c.h.b16 %v236
    %v954 = vunpack.c.l.b16 %v237
    %v955 = vunpack.c.h.b16 %v237
    %v956 = vunpack.c.l.b16 %v238
    %v957 = vunpack.c.h.b16 %v238
    %v958 = vunpack.c.l.b16 %v239
    %v959 = vunpack.c.h.b16 %v239
    %v960 = vunpack.c.l.b16 %v240
    %v961 = vunpack.c.h.b16 %v240
    %v962 = vunpack.c.l.b16 %v241
    %v963 = vunpack.c.h.b16 %v241
    %v964 = vunpack.c.l.b16 %v242
    %v965 = vunpack.c.h.b16 %v242
    %v966 = vunpack.c.l.b16 %v243
    %v967 = vunpack.c.h.b16 %v243
    %v968 = vunpack.c.l.b16 %v244
    %v969 = vunpack.c.h.b16 %v244
    %v970 = vunpack.c.l.b16 %v245
    %v971 = vunpack.c.h.b16 %v245
    %v972 = vunpack.c.l.b16 %v246
    %v973 = vunpack.c.h.b16 %v246
    %v974 = vunpack.c.l.b16 %v247
    %v975 = vunpack.c.h.b16 %v247
    %v976 = vunpack.c.l.b16 %v248
    %v977 = vunpack.c.h.b16 %v248
    %v978 = vunpack.c.l.b16 %v249
    %v979 = vunpack.c.h.b16 %v249
    %v980 = vunpack.c.l.b16 %v250
    %v981 = vunpack.c.h.b16 %v250
    %v982 = vunpack.c.l.b16 %v251
    %v983 = vunpack.c.h.b16 %v251
    %v984 = vunpack.c.l.b16 %v252
    %v985 = vunpack.c.h.b16 %v252
    %v986 = vunpack.c.l.b16 %v253
    %v987 = vunpack.c.h.b16 %v253
    %v988 = vunpack.c.l.b16 %v254
    %v989 = vunpack.c.h.b16 %v254
    %v990 = vunpack.c.l.b16 %v255
    %v991 = vunpack.c.h.b16 %v255
    %v992 = vunpack.c.l.b16 %v256
    %v993 = vunpack.c.h.b16 %v256
    %v994 = vunpack.c.l.b16 %v257
    %v995 = vunpack.c.h.b16 %v257
    %v996 = vunpack.c.l.b16 %v258
    %v997 = vunpack.c.h.b16 %v258
    %v998 = vunpack.c.l.b16 %v259
    %v999 = vunpack.c.h.b16 %v259
    %v1000 = vunpack.c.l.b16 %v260
    %v1001 = vunpack.c.h.b16 %v260
    %v1002 = vunpack.c.l.b16 %v261
    %v1003 = vunpack.c.h.b16 %v261
    %v1004 = vunpack.c.l.b16 %v262
    %v1005 = vunpack.c.h.b16 %v262
    %v1006 = vunpack.c.l.b16 %v263
    %v1007 = vunpack.c.h.b16 %v263
    %v1008 = vunpack.c.l.b16 %v264
    %v1009 = vunpack.c.h.b16 %v264
    %v1010 = vunpack.c.l.b16 %v265
    %v1011 = vunpack.c.h.b16 %v265
    %v1012 = vunpack.c.l.b16 %v266
    %v1013 = vunpack.c.h.b16 %v266
    %v1014 = vunpack.c.l.b16 %v267
    %v1015 = vunpack.c.h.b16 %v267
    %v1016 = vunpack.c.l.b16 %v268
    %v1017 = vunpack.c.h.b16 %v268
    %v1018 = vunpack.c.l.b16 %v269
    %v1019 = vunpack.c.h.b16 %v269
    %v1020 = vunpack.c.l.b16 %v270
    %v1021 = vunpack.c.h.b16 %v270
    %v1022 = vunpack.c.l.b16 %v271
    %v1023 = vunpack.c.h.b16 %v271
    %v1024 = vunpack.c.l.b16 %v272
    %v1025 = vunpack.c.h.b16 %v272
    %v1026 = vunpack.c.l.b16 %v273
    %v1027 = vunpack.c.h.b16 %v273
    %v1028 = vunpack.c.l.b16 %v274
    %v1029 = vunpack.c.h.b16 %v274
    %v1030 = vunpack.c.l.b16 %v275
    %v1031 = vunpack.c.h.b16 %v275
    %v1032 = vunpack.c.l.b16 %v276
    %v1033 = vunpack.c.h.b16 %v276
    %v1034 = vunpack.c.l.b16 %v277
    %v1035 = vunpack.c.h.b16 %v277
    %v1036 = vunpack.c.l.b16 %v278
    %v1037 = vunpack.c.h.b16 %v278
    %v1038 = vunpack.c.l.b16 %v279
    %v1039 = vunpack.c.h.b16 %v279
    %v1040 = vunpack.c.l.b16 %v280
    %v1041 = vunpack.c.h.b16 %v280
    %v1042 = vunpack.c.l.b16 %v281
    %v1043 = vunpack.c.h.b16 %v281
    %v1044 = vunpack.c.l.b16 %v282
    %v1045 = vunpack.c.h.b16 %v282
    %v1046 = vunpack.c.l.b16 %v283
    %v1047 = vunpack.c.h.b16 %v283
    %v1048 = vunpack.c.l.b16 %v284
    %v1049 = vunpack.c.h.b16 %v284
    %v1050 = vunpack.c.l.b16 %v285
    %v1051 = vunpack.c.h.b16 %v285
    %v1052 = vunpack.c.l.b16 %v286
    %v1053 = vunpack.c.h.b16 %v286
    %v1054 = vunpack.c.l.b16 %v287
    %v1055 = vunpack.c.h.b16 %v287
    %v1056 = vunpack.c.l.b16 %v288
    %v1057 = vunpack.c.h.b16 %v288
    %v1058 = vunpack.c.l.b16 %v289
    %v1059 = vunpack.c.h.b16 %v289
    %v1060 = vunpack.c.l.b16 %v290
    %v1061 = vunpack.c.h.b16 %v290
    %v1062 = vunpack.c.l.b16 %v291
    %v1063 = vunpack.c.h.b16 %v291
    %v1064 = vunpack.c.l.b16 %v292
    %v1065 = vunpack.c.h.b16 %v292
    %v1066 = vunpack.c.l.b16 %v293
    %v1067 = vunpack.c.h.b16 %v293
    %v1068 = vunpack.c.l.b16 %v294
    %v1069 = vunpack.c.h.b16 %v294
    %v1070 = vunpack.c.l.b16 %v295
    %v1071 = vunpack.c.h.b16 %v295
    %v1072 = vunpack.c.l.b16 %v296
    %v1073 = vunpack.c.h.b16 %v296
    %v1074 = vunpack.c.l.b16 %v297
    %v1075 = vunpack.c.h.b16 %v297
    %v1076 = vunpack.c.l.b16 %v298
    %v1077 = vunpack.c.h.b16 %v298
    %v1078 = vunpack.c.l.b16 %v299
    %v1079 = vunpack.c.h.b16 %v299
    %v1080 = vunpack.c.l.b16 %v300
    %v1081 = vunpack.c.h.b16 %v300
    %v1082 = vunpack.c.l.b16 %v301
    %v1083 = vunpack.c.h.b16 %v301
    %v1084 = vunpack.c.l.b16 %v302
    %v1085 = vunpack.c.h.b16 %v302
    %v1086 = vunpack.c.l.b16 %v303
    %v1087 = vunpack.c.h.b16 %v303
    %v1088 = vunpack.c.l.b16 %v304
    %v1089 = vunpack.c.h.b16 %v304
    %v1090 = vunpack.c.l.b16 %v305
    %v1091 = vunpack.c.h.b16 %v305
    %v1092 = vunpack.c.l.b16 %v306
    %v1093 = vunpack.c.h.b16 %v306
    %v1094 = vunpack.c.l.b16 %v307
    %v1095 = vunpack.c.h.b16 %v307
    %v1096 = vunpack.c.l.b16 %v308
    %v1097 = vunpack.c.h.b16 %v308
    %v1098 = vunpack.c.l.b16 %v309
    %v1099 = vunpack.c.h.b16 %v309
    %v1100 = vunpack.c.l.b16 %v310
    %v1101 = vunpack.c.h.b16 %v310
    %v1102 = vunpack.c.l.b16 %v311
    %v1103 = vunpack.c.h.b16 %v311
    %v1104 = vunpack.c.l.b16 %v312
    %v1105 = vunpack.c.h.b16 %v312
    %v1106 = vunpack.c.l.b16 %v313
    %v1107 = vunpack.c.h.b16 %v313
    %v1108 = vunpack.c.l.b16 %v314
    %v1109 = vunpack.c.h.b16 %v314
    %v1110 = vunpack.c.l.b16 %v315
    %v1111 = vunpack.c.h.b16 %v315
    %v1112 = vunpack.c.l.b16 %v316
    %v1113 = vunpack.c.h.b16 %v316
    %v1114 = vunpack.c.l.b16 %v317
    %v1115 = vunpack.c.h.b16 %v317
    %v1116 = vunpack.c.l.b16 %v318
    %v1117 = vunpack.c.h.b16 %v318
    %v1118 = vunpack.c.l.b16 %v319
    %v1119 = vunpack.c.h.b16 %v319
    %v1120 = vpack.c.b16 %v612, %v608
    %v1121 = vpack.c.b16 %v613, %v609
    %v1122 = vpack.c.b16 %v614, %v610
    %v1123 = vpack.c.b16 %v615, %v611
    %v1124 = vpack.c.b16 %v620, %v616
    %v1125 = vpack.c.b16 %v621, %v617
    %v1126 = vpack.c.b16 %v622, %v618
    %v1127 = vpack.c.b16 %v623, %v619
    %v1128 = vpack.c.b16 %v628, %v624
    %v1129 = vpack.c.b16 %v629, %v625
    %v1130 = vpack.c.b16 %v630, %v626
    %v1131 = vpack.c.b16 %v631, %v627
    %v1132 = vpack.c.b16 %v636, %v632
    %v1133 = vpack.c.b16 %v637, %v633
    %v1134 = vpack.c.b16 %v638, %v634
    %v1135 = vpack.c.b16 %v639, %v635
    %v1136 = vpack.c.b16 %v644, %v640
    %v1137 = vpack.c.b16 %v645, %v641
    %v1138 = vpack.c.b16 %v646, %v642
    %v1139 = vpack.c.b16 %v647, %v643
    %v1140 = vpack.c.b16 %v652, %v648
    %v1141 = vpack.c.b16 %v653, %v649
    %v1142 = vpack.c.b16 %v654, %v650
    %v1143 = vpack.c.b16 %v655, %v651
    %v1144 = vpack.c.b16 %v660, %v656
    %v1145 = vpack.c.b16 %v661, %v657
    %v1146 = vpack.c.b16 %v662, %v658
    %v1147 = vpack.c.b16 %v663, %v659
    %v1148 = vpack.c.b16 %v668, %v664
    %v1149 = vpack.c.b16 %v669, %v665
    %v1150 = vpack.c.b16 %v670, %v666
    %v1151 = vpack.c.b16 %v671, %v667
    %v1152 = vpack.c.b16 %v676, %v672
    %v1153 = vpack.c.b16 %v677, %v673
    %v1154 = vpack.c.b16 %v678, %v674
    %v1155 = vpack.c.b16 %v679, %v675
    %v1156 = vpack.c.b16 %v684, %v680
    %v1157 = vpack.c.b16 %v685, %v681
    %v1158 = vpack.c.b16 %v686, %v682
    %v1159 = vpack.c.b16 %v687, %v683
    %v1160 = vpack.c.b16 %v692, %v688
    %v1161 = vpack.c.b16 %v693, %v689
    %v1162 = vpack.c.b16 %v694, %v690
    %v1163 = vpack.c.b16 %v695, %v691
    %v1164 = vpack.c.b16 %v700, %v696
    %v1165 = vpack.c.b16 %v701, %v697
    %v1166 = vpack.c.b16 %v702, %v698
    %v1167 = vpack.c.b16 %v703, %v699
    %v1168 = vpack.c.b16 %v708, %v704
    %v1169 = vpack.c.b16 %v709, %v705
    %v1170 = vpack.c.b16 %v710, %v706
    %v1171 = vpack.c.b16 %v711, %v707
    %v1172 = vpack.c.b16 %v716, %v712
    %v1173 = vpack.c.b16 %v717, %v713
    %v1174 = vpack.c.b16 %v718, %v714
    %v1175 = vpack.c.b16 %v719, %v715
    %v1176 = vpack.c.b16 %v724, %v720
    %v1177 = vpack.c.b16 %v725, %v721
    %v1178 = vpack.c.b16 %v726, %v722
    %v1179 = vpack.c.b16 %v727, %v723
    %v1180 = vpack.c.b16 %v732, %v728
    %v1181 = vpack.c.b16 %v733, %v729
    %v1182 = vpack.c.b16 %v734, %v730
    %v1183 = vpack.c.b16 %v735, %v731
    %v1184 = vpack.c.b16 %v740, %v736
    %v1185 = vpack.c.b16 %v741, %v737
    %v1186 = vpack.c.b16 %v742, %v738
    %v1187 = vpack.c.b16 %v743, %v739
    %v1188 = vpack.c.b16 %v748, %v744
    %v1189 = vpack.c.b16 %v749, %v745
    %v1190 = vpack.c.b16 %v750, %v746
    %v1191 = vpack.c.b16 %v751, %v747
    %v1192 = vpack.c.b16 %v756, %v752
    %v1193 = vpack.c.b16 %v757, %v753
    %v1194 = vpack.c.b16 %v758, %v754
    %v1195 = vpack.c.b16 %v759, %v755
    %v1196 = vpack.c.b16 %v764, %v760
    %v1197 = vpack.c.b16 %v765, %v761
    %v1198 = vpack.c.b16 %v766, %v762
    %v1199 = vpack.c.b16 %v767, %v763
    %v1200 = vpack.c.b16 %v772, %v768
    %v1201 = vpack.c.b16 %v773, %v769
    %v1202 = vpack.c.b16 %v774, %v770
    %v1203 = vpack.c.b16 %v775, %v771
    %v1204 = vpack.c.b16 %v780, %v776
    %v1205 = vpack.c.b16 %v781, %v777
    %v1206 = vpack.c.b16 %v782, %v778
    %v1207 = vpack.c.b16 %v783, %v779
    %v1208 = vpack.c.b16 %v788, %v784
    %v1209 = vpack.c.b16 %v789, %v785
    %v1210 = vpack.c.b16 %v790, %v786
    %v1211 = vpack.c.b16 %v791, %v787
    %v1212 = vpack.c.b16 %v796, %v792
    %v1213 = vpack.c.b16 %v797, %v793
    %v1214 = vpack.c.b16 %v798, %v794
    %v1215 = vpack.c.b16 %v799, %v795
    %v1216 = vpack.c.b16 %v804, %v800
    %v1217 = vpack.c.b16 %v805, %v801
    %v1218 = vpack.c.b16 %v806, %v802
    %v1219 = vpack.c.b16 %v807, %v803
    %v1220 = vpack.c.b16 %v812, %v808
    %v1221 = vpack.c.b16 %v813, %v809
    %v1222 = vpack.c.b16 %v814, %v810
    %v1223 = vpack.c.b16 %v815, %v811
    %v1224 = vpack.c.b16 %v820, %v816
    %v1225 = vpack.c.b16 %v821, %v817
    %v1226 = vpack.c.b16 %v822, %v818
    %v1227 = vpack.c.b16 %v823, %v819
    %v1228 = vpack.c.b16 %v828, %v824
    %v1229 = vpack.c.b16 %v829, %v825
    %v1230 = vpack.c.b16 %v830, %v826
    %v1231 = vpack.c.b16 %v831, %v827
    %v1232 = vpack.c.b16 %v836, %v832
    %v1233 = vpack.c.b16 %v837, %v833
    %v1234 = vpack.c.b16 %v838, %v834
    %v1235 = vpack.c.b16 %v839, %v835
    %v1236 = vpack.c.b16 %v844, %v840
    %v1237 = vpack.c.b16 %v845, %v841
    %v1238 = vpack.c.b16 %v846, %v842
    %v1239 = vpack.c.b16 %v847, %v843
    %v1240 = vpack.c.b16 %v852, %v848
    %v1241 = vpack.c.b16 %v853, %v849
    %v1242 = vpack.c.b16 %v854, %v850
    %v1243 = vpack.c.b16 %v855, %v851
    %v1244 = vpack.c.b16 %v860, %v856
    %v1245 = vpack.c.b16 %v861, %v857
    %v1246 = vpack.c.b16 %v862, %v858
    %v1247 = vpack.c.b16 %v863, %v859
    %v1248 = vpack.c.b16 %v868, %v864
    %v1249 = vpack.c.b16 %v869, %v865
    %v1250 = vpack.c.b16 %v870, %v866
    %v1251 = vpack.c.b16 %v871, %v867
    %v1252 = vpack.c.b16 %v876, %v872
    %v1253 = vpack.c.b16 %v877, %v873
    %v1254 = vpack.c.b16 %v878, %v874
    %v1255 = vpack.c.b16 %v879, %v875
    %v1256 = vpack.c.b16 %v884, %v880
    %v1257 = vpack.c.b16 %v885, %v881
    %v1258 = vpack.c.b16 %v886, %v882
    %v1259 = vpack.c.b16 %v887, %v883
    %v1260 = vpack.c.b16 %v892, %v888
    %v1261 = vpack.c.b16 %v893, %v889
    %v1262 = vpack.c.b16 %v894, %v890
    %v1263 = vpack.c.b16 %v895, %v891
    %v1264 = vpack.c.b16 %v900, %v896
    %v1265 = vpack.c.b16 %v901, %v897
    %v1266 = vpack.c.b16 %v902, %v898
    %v1267 = vpack.c.b16 %v903, %v899
    %v1268 = vpack.c.b16 %v908, %v904
    %v1269 = vpack.c.b16 %v909, %v905
    %v1270 = vpack.c.b16 %v910, %v906
    %v1271 = vpack.c.b16 %v911, %v907
    %v1272 = vpack.c.b16 %v916, %v912
    %v1273 = vpack.c.b16 %v917, %v913
    %v1274 = vpack.c.b16 %v918, %v914
    %v1275 = vpack.c.b16 %v919, %v915
    %v1276 = vpack.c.b16 %v924, %v920
    %v1277 = vpack.c.b16 %v925, %v921
    %v1278 = vpack.c.b16 %v926, %v922
    %v1279 = vpack.c.b16 %v927, %v923
    %v1280 = vpack.c.b16 %v932, %v928
    %v1281 = vpack.c.b16 %v933, %v929
    %v1282 = vpack.c.b16 %v934, %v930
    %v1283 = vpack.c.b16 %v935, %v931
    %v1284 = vpack.c.b16 %v940, %v936
    %v1285 = vpack.c.b16 %v941, %v937
    %v1286 = vpack.c.b16 %v942, %v938
    %v1287 = vpack.c.b16 %v943, %v939
    %v1288 = vpack.c.b16 %v948, %v944
    %v1289 = vpack.c.b16 %v949, %v945
    %v1290 = vpack.c.b16 %v950, %v946
    %v1291 = vpack.c.b16 %v951, %v947
    %v1292 = vpack.c.b16 %v956, %v952
    %v1293 = vpack.c.b16 %v957, %v953
    %v1294 = vpack.c.b16 %v958, %v954
    %v1295 = vpack.c.b16 %v959, %v955
    %v1296 = vpack.c.b16 %v964, %v960
    %v1297 = vpack.c.b16 %v965, %v961
    %v1298 = vpack.c.b16 %v966, %v962
    %v1299 = vpack.c.b16 %v967, %v963
    %v1300 = vpack.c.b16 %v972, %v968
    %v1301 = vpack.c.b16 %v973, %v969
    %v1302 = vpack.c.b16 %v974, %v970
    %v1303 = vpack.c.b16 %v975, %v971
    %v1304 = vpack.c.b16 %v980, %v976
    %v1305 = vpack.c.b16 %v981, %v977
    %v1306 = vpack.c.b16 %v982, %v978
    %v1307 = vpack.c.b16 %v983, %v979
    %v1308 = vpack.c.b16 %v988, %v984
    %v1309 = vpack.c.b16 %v989, %v985
    %v1310 = vpack.c.b16 %v990, %v986
    %v1311 = vpack.c.b16 %v991, %v987
    %v1312 = vpack.c.b16 %v996, %v992
    %v1313 = vpack.c.b16 %v997, %v993
    %v1314 = vpack.c.b16 %v998, %v994
    %v1315 = vpack.c.b16 %v999, %v995
    %v1316 = vpack.c.b16 %v1004, %v1000
    %v1317 = vpack.c.b16 %v1005, %v1001
    %v1318 = vpack.c.b16 %v1006, %v1002
    %v1319 = vpack.c.b16 %v1007, %v1003
    %v1320 = vpack.c.b16 %v1012, %v1008
    %v1321 = vpack.c.b16 %v1013, %v1009
    %v1322 = vpack.c.b16 %v1014, %v1010
    %v1323 = vpack.c.b16 %v1015, %v1011
    %v1324 = vpack.c.b16 %v1020, %v1016
    %v1325 = vpack.c.b16 %v1021, %v1017
    %v1326 = vpack.c.b16 %v1022, %v1018
    %v1327 = vpack.c.b16 %v1023, %v1019
    %v1328 = vpack.c.b16 %v1028, %v1024
    %v1329 = vpack.c.b16 %v1029, %v1025
    %v1330 = vpack.c.b16 %v1030, %v1026
    %v1331 = vpack.c.b16 %v1031, %v1027
    %v1332 = vpack.c.b16 %v1036, %v1032
    %v1333 = vpack.c.b16 %v1037, %v1033
    %v1334 = vpack.c.b16 %v1038, %v1034
    %v1335 = vpack.c.b16 %v1039, %v1035
    %v1336 = vpack.c.b16 %v1044, %v1040
    %v1337 = vpack.c.b16 %v1045, %v1041
    %v1338 = vpack.c.b16 %v1046, %v1042
    %v1339 = vpack.c.b16 %v1047, %v1043
    %v1340 = vpack.c.b16 %v1052, %v1048
    %v1341 = vpack.c.b16 %v1053, %v1049
    %v1342 = vpack.c.b16 %v1054, %v1050
    %v1343 = vpack.c.b16 %v1055, %v1051
    %v1344 = vpack.c.b16 %v1060, %v1056
    %v1345 = vpack.c.b16 %v1061, %v1057
    %v1346 = vpack.c.b16 %v1062, %v1058
    %v1347 = vpack.c.b16 %v1063, %v1059
    %v1348 = vpack.c.b16 %v1068, %v1064
    %v1349 = vpack.c.b16 %v1069, %v1065
    %v1350 = vpack.c.b16 %v1070, %v1066
    %v1351 = vpack.c.b16 %v1071, %v1067
    %v1352 = vpack.c.b16 %v1076, %v1072
    %v1353 = vpack.c.b16 %v1077, %v1073
    %v1354 = vpack.c.b16 %v1078, %v1074
    %v1355 = vpack.c.b16 %v1079, %v1075
    %v1356 = vpack.c.b16 %v1084, %v1080
    %v1357 = vpack.c.b16 %v1085, %v1081
    %v1358 = vpack.c.b16 %v1086, %v1082
    %v1359 = vpack.c.b16 %v1087, %v1083
    %v1360 = vpack.c.b16 %v1092, %v1088
    %v1361 = vpack.c.b16 %v1093, %v1089
    %v1362 = vpack.c.b16 %v1094, %v1090
    %v1363 = vpack.c.b16 %v1095, %v1091
    %v1364 = vpack.c.b16 %v1100, %v1096
    %v1365 = vpack.c.b16 %v1101, %v1097
    %v1366 = vpack.c.b16 %v1102, %v1098
    %v1367 = vpack.c.b16 %v1103, %v1099
    %v1368 = vpack.c.b16 %v1108, %v1104
    %v1369 = vpack.c.b16 %v1109, %v1105
    %v1370 = vpack.c.b16 %v1110, %v1106
    %v1371 = vpack.c.b16 %v1111, %v1107
    %v1372 = vpack.c.b16 %v1116, %v1112
    %v1373 = vpack.c.b16 %v1117, %v1113
    %v1374 = vpack.c.b16 %v1118, %v1114
    %v1375 = vpack.c.b16 %v1119, %v1115
    %1632 = vmatpush.bf16.msra.mxu0 %v1148
    %1633 = vmatpush.bf16.msra.mxu0 %v1144
    %1634 = vmatpush.bf16.msra.mxu0 %v1140
    %1635 = vmatpush.bf16.msra.mxu0 %v1136
    %1636 = vmatpush.bf16.msra.mxu0 %v1132
    %1637 = vmatpush.bf16.msra.mxu0 %v1128
    %1638 = vmatpush.bf16.msra.mxu0 %v1124
    %1639 = vmatpush.bf16.msra.mxu0 %v1120
    %1640 = vmatmul.bf16.gmra.mxu0 %v336
    %v1641 = vpop.f32.mrf.mxu0
    %v1642 = vadd.f32 %v320, %v1641
    %v1643 = vpop.f32.mrf.mxu0
    %1644 = vdwg.mxu0
    %1645 = vmatpush.bf16.msra.mxu0 %v1180
    %1646 = vmatpush.bf16.msra.mxu0 %v1176
    %1647 = vmatpush.bf16.msra.mxu0 %v1172
    %1648 = vmatpush.bf16.msra.mxu0 %v1168
    %1649 = vmatpush.bf16.msra.mxu0 %v1164
    %1650 = vmatpush.bf16.msra.mxu0 %v1160
    %1651 = vmatpush.bf16.msra.mxu0 %v1156
    %1652 = vmatpush.bf16.msra.mxu0 %v1152
    %1653 = vmatmul.bf16.gmra.mxu0 %v337
    %v1654 = vpop.f32.mrf.mxu0
    %v1655 = vadd.f32 %v1642, %v1654
    %v1656 = vpop.f32.mrf.mxu0
    %1657 = vdwg.mxu0
    %1658 = vmatpush.bf16.msra.mxu0 %v1212
    %1659 = vmatpush.bf16.msra.mxu0 %v1208
    %1660 = vmatpush.bf16.msra.mxu0 %v1204
    %1661 = vmatpush.bf16.msra.mxu0 %v1200
    %1662 = vmatpush.bf16.msra.mxu0 %v1196
    %1663 = vmatpush.bf16.msra.mxu0 %v1192
    %1664 = vmatpush.bf16.msra.mxu0 %v1188
    %1665 = vmatpush.bf16.msra.mxu0 %v1184
    %1666 = vmatmul.bf16.gmra.mxu0 %v338
    %v1667 = vpop.f32.mrf.mxu0
    %v1668 = vadd.f32 %v1655, %v1667
    %v1669 = vpop.f32.mrf.mxu0
    %1670 = vdwg.mxu0
    %1671 = vmatpush.bf16.msra.mxu0 %v1244
    %1672 = vmatpush.bf16.msra.mxu0 %v1240
    %1673 = vmatpush.bf16.msra.mxu0 %v1236
    %1674 = vmatpush.bf16.msra.mxu0 %v1232
    %1675 = vmatpush.bf16.msra.mxu0 %v1228
    %1676 = vmatpush.bf16.msra.mxu0 %v1224
    %1677 = vmatpush.bf16.msra.mxu0 %v1220
    %1678 = vmatpush.bf16.msra.mxu0 %v1216
    %1679 = vmatmul.bf16.gmra.mxu0 %v339
    %v1680 = vpop.f32.mrf.mxu0
    %v1681 = vadd.f32 %v1668, %v1680
    %v1682 = vpop.f32.mrf.mxu0
    %1683 = vdwg.mxu0
    %1684 = vmatpush.bf16.msra.mxu0 %v1276
    %1685 = vmatpush.bf16.msra.mxu0 %v1272
    %1686 = vmatpush.bf16.msra.mxu0 %v1268
    %1687 = vmatpush.bf16.msra.mxu0 %v1264
    %1688 = vmatpush.bf16.msra.mxu0 %v1260
    %1689 = vmatpush.bf16.msra.mxu0 %v1256
    %1690 = vmatpush.bf16.msra.mxu0 %v1252
    %1691 = vmatpush.bf16.msra.mxu0 %v1248
    %1692 = vmatmul.bf16.gmra.mxu0 %v340
    %v1693 = vpop.f32.mrf.mxu0
    %v1694 = vadd.f32 %v1681, %v1693
    %v1695 = vpop.f32.mrf.mxu0
    %1696 = vdwg.mxu0
    %1697 = vmatpush.bf16.msra.mxu0 %v1308
    %1698 = vmatpush.bf16.msra.mxu0 %v1304
    %1699 = vmatpush.bf16.msra.mxu0 %v1300
    %1700 = vmatpush.bf16.msra.mxu0 %v1296
    %1701 = vmatpush.bf16.msra.mxu0 %v1292
    %1702 = vmatpush.bf16.msra.mxu0 %v1288
    %1703 = vmatpush.bf16.msra.mxu0 %v1284
    %1704 = vmatpush.bf16.msra.mxu0 %v1280
    %1705 = vmatmul.bf16.gmra.mxu0 %v341
    %v1706 = vpop.f32.mrf.mxu0
    %v1707 = vadd.f32 %v1694, %v1706
    %v1708 = vpop.f32.mrf.mxu0
    %1709 = vdwg.mxu0
    %1710 = vmatpush.bf16.msra.mxu0 %v1340
    %1711 = vmatpush.bf16.msra.mxu0 %v1336
    %1712 = vmatpush.bf16.msra.mxu0 %v1332
    %1713 = vmatpush.bf16.msra.mxu0 %v1328
    %1714 = vmatpush.bf16.msra.mxu0 %v1324
    %1715 = vmatpush.bf16.msra.mxu0 %v1320
    %1716 = vmatpush.bf16.msra.mxu0 %v1316
    %1717 = vmatpush.bf16.msra.mxu0 %v1312
    %1718 = vmatmul.bf16.gmra.mxu0 %v342
    %v1719 = vpop.f32.mrf.mxu0
    %v1720 = vadd.f32 %v1707, %v1719
    %v1721 = vpop.f32.mrf.mxu0
    %1722 = vdwg.mxu0
    %1723 = vmatpush.bf16.msra.mxu0 %v1372
    %1724 = vmatpush.bf16.msra.mxu0 %v1368
    %1725 = vmatpush.bf16.msra.mxu0 %v1364
    %1726 = vmatpush.bf16.msra.mxu0 %v1360
    %1727 = vmatpush.bf16.msra.mxu0 %v1356
    %1728 = vmatpush.bf16.msra.mxu0 %v1352
    %1729 = vmatpush.bf16.msra.mxu0 %v1348
    %1730 = vmatpush.bf16.msra.mxu0 %v1344
    %1731 = vmatmul.bf16.gmra.mxu0 %v343
    %v1732 = vpop.f32.mrf.mxu0
    %v1733 = vadd.f32 %v1720, %v1732
    %v1734 = vpop.f32.mrf.mxu0
    %1735 = vdwg.mxu0
    %1736 = vmatpush.bf16.msra.mxu0 %v1149
    %1737 = vmatpush.bf16.msra.mxu0 %v1145
    %1738 = vmatpush.bf16.msra.mxu0 %v1141
    %1739 = vmatpush.bf16.msra.mxu0 %v1137
    %1740 = vmatpush.bf16.msra.mxu0 %v1133
    %1741 = vmatpush.bf16.msra.mxu0 %v1129
    %1742 = vmatpush.bf16.msra.mxu0 %v1125
    %1743 = vmatpush.bf16.msra.mxu0 %v1121
    %1744 = vmatmul.bf16.gmra.mxu0 %v336
    %v1745 = vpop.f32.mrf.mxu0
    %v1746 = vadd.f32 %v321, %v1745
    %v1747 = vpop.f32.mrf.mxu0
    %1748 = vdwg.mxu0
    %1749 = vmatpush.bf16.msra.mxu0 %v1181
    %1750 = vmatpush.bf16.msra.mxu0 %v1177
    %1751 = vmatpush.bf16.msra.mxu0 %v1173
    %1752 = vmatpush.bf16.msra.mxu0 %v1169
    %1753 = vmatpush.bf16.msra.mxu0 %v1165
    %1754 = vmatpush.bf16.msra.mxu0 %v1161
    %1755 = vmatpush.bf16.msra.mxu0 %v1157
    %1756 = vmatpush.bf16.msra.mxu0 %v1153
    %1757 = vmatmul.bf16.gmra.mxu0 %v337
    %v1758 = vpop.f32.mrf.mxu0
    %v1759 = vadd.f32 %v1746, %v1758
    %v1760 = vpop.f32.mrf.mxu0
    %1761 = vdwg.mxu0
    %1762 = vmatpush.bf16.msra.mxu0 %v1213
    %1763 = vmatpush.bf16.msra.mxu0 %v1209
    %1764 = vmatpush.bf16.msra.mxu0 %v1205
    %1765 = vmatpush.bf16.msra.mxu0 %v1201
    %1766 = vmatpush.bf16.msra.mxu0 %v1197
    %1767 = vmatpush.bf16.msra.mxu0 %v1193
    %1768 = vmatpush.bf16.msra.mxu0 %v1189
    %1769 = vmatpush.bf16.msra.mxu0 %v1185
    %1770 = vmatmul.bf16.gmra.mxu0 %v338
    %v1771 = vpop.f32.mrf.mxu0
    %v1772 = vadd.f32 %v1759, %v1771
    %v1773 = vpop.f32.mrf.mxu0
    %1774 = vdwg.mxu0
    %1775 = vmatpush.bf16.msra.mxu0 %v1245
    %1776 = vmatpush.bf16.msra.mxu0 %v1241
    %1777 = vmatpush.bf16.msra.mxu0 %v1237
    %1778 = vmatpush.bf16.msra.mxu0 %v1233
    %1779 = vmatpush.bf16.msra.mxu0 %v1229
    %1780 = vmatpush.bf16.msra.mxu0 %v1225
    %1781 = vmatpush.bf16.msra.mxu0 %v1221
    %1782 = vmatpush.bf16.msra.mxu0 %v1217
    %1783 = vmatmul.bf16.gmra.mxu0 %v339
    %v1784 = vpop.f32.mrf.mxu0
    %v1785 = vadd.f32 %v1772, %v1784
    %v1786 = vpop.f32.mrf.mxu0
    %1787 = vdwg.mxu0
    %1788 = vmatpush.bf16.msra.mxu0 %v1277
    %1789 = vmatpush.bf16.msra.mxu0 %v1273
    %1790 = vmatpush.bf16.msra.mxu0 %v1269
    %1791 = vmatpush.bf16.msra.mxu0 %v1265
    %1792 = vmatpush.bf16.msra.mxu0 %v1261
    %1793 = vmatpush.bf16.msra.mxu0 %v1257
    %1794 = vmatpush.bf16.msra.mxu0 %v1253
    %1795 = vmatpush.bf16.msra.mxu0 %v1249
    %1796 = vmatmul.bf16.gmra.mxu0 %v340
    %v1797 = vpop.f32.mrf.mxu0
    %v1798 = vadd.f32 %v1785, %v1797
    %v1799 = vpop.f32.mrf.mxu0
    %1800 = vdwg.mxu0
    %1801 = vmatpush.bf16.msra.mxu0 %v1309
    %1802 = vmatpush.bf16.msra.mxu0 %v1305
    %1803 = vmatpush.bf16.msra.mxu0 %v1301
    %1804 = vmatpush.bf16.msra.mxu0 %v1297
    %1805 = vmatpush.bf16.msra.mxu0 %v1293
    %1806 = vmatpush.bf16.msra.mxu0 %v1289
    %1807 = vmatpush.bf16.msra.mxu0 %v1285
    %1808 = vmatpush.bf16.msra.mxu0 %v1281
    %1809 = vmatmul.bf16.gmra.mxu0 %v341
    %v1810 = vpop.f32.mrf.mxu0
    %v1811 = vadd.f32 %v1798, %v1810
    %v1812 = vpop.f32.mrf.mxu0
    %1813 = vdwg.mxu0
    %1814 = vmatpush.bf16.msra.mxu0 %v1341
    %1815 = vmatpush.bf16.msra.mxu0 %v1337
    %1816 = vmatpush.bf16.msra.mxu0 %v1333
    %1817 = vmatpush.bf16.msra.mxu0 %v1329
    %1818 = vmatpush.bf16.msra.mxu0 %v1325
    %1819 = vmatpush.bf16.msra.mxu0 %v1321
    %1820 = vmatpush.bf16.msra.mxu0 %v1317
    %1821 = vmatpush.bf16.msra.mxu0 %v1313
    %1822 = vmatmul.bf16.gmra.mxu0 %v342
    %v1823 = vpop.f32.mrf.mxu0
    %v1824 = vadd.f32 %v1811, %v1823
    %v1825 = vpop.f32.mrf.mxu0
    %1826 = vdwg.mxu0
    %1827 = vmatpush.bf16.msra.mxu0 %v1373
    %1828 = vmatpush.bf16.msra.mxu0 %v1369
    %1829 = vmatpush.bf16.msra.mxu0 %v1365
    %1830 = vmatpush.bf16.msra.mxu0 %v1361
    %1831 = vmatpush.bf16.msra.mxu0 %v1357
    %1832 = vmatpush.bf16.msra.mxu0 %v1353
    %1833 = vmatpush.bf16.msra.mxu0 %v1349
    %1834 = vmatpush.bf16.msra.mxu0 %v1345
    %1835 = vmatmul.bf16.gmra.mxu0 %v343
    %v1836 = vpop.f32.mrf.mxu0
    %v1837 = vadd.f32 %v1824, %v1836
    %v1838 = vpop.f32.mrf.mxu0
    %1839 = vdwg.mxu0
    %1840 = vmatpush.bf16.msra.mxu0 %v1150
    %1841 = vmatpush.bf16.msra.mxu0 %v1146
    %1842 = vmatpush.bf16.msra.mxu0 %v1142
    %1843 = vmatpush.bf16.msra.mxu0 %v1138
    %1844 = vmatpush.bf16.msra.mxu0 %v1134
    %1845 = vmatpush.bf16.msra.mxu0 %v1130
    %1846 = vmatpush.bf16.msra.mxu0 %v1126
    %1847 = vmatpush.bf16.msra.mxu0 %v1122
    %1848 = vmatmul.bf16.gmra.mxu0 %v336
    %v1849 = vpop.f32.mrf.mxu0
    %v1850 = vadd.f32 %v322, %v1849
    %v1851 = vpop.f32.mrf.mxu0
    %1852 = vdwg.mxu0
    %1853 = vmatpush.bf16.msra.mxu0 %v1182
    %1854 = vmatpush.bf16.msra.mxu0 %v1178
    %1855 = vmatpush.bf16.msra.mxu0 %v1174
    %1856 = vmatpush.bf16.msra.mxu0 %v1170
    %1857 = vmatpush.bf16.msra.mxu0 %v1166
    %1858 = vmatpush.bf16.msra.mxu0 %v1162
    %1859 = vmatpush.bf16.msra.mxu0 %v1158
    %1860 = vmatpush.bf16.msra.mxu0 %v1154
    %1861 = vmatmul.bf16.gmra.mxu0 %v337
    %v1862 = vpop.f32.mrf.mxu0
    %v1863 = vadd.f32 %v1850, %v1862
    %v1864 = vpop.f32.mrf.mxu0
    %1865 = vdwg.mxu0
    %1866 = vmatpush.bf16.msra.mxu0 %v1214
    %1867 = vmatpush.bf16.msra.mxu0 %v1210
    %1868 = vmatpush.bf16.msra.mxu0 %v1206
    %1869 = vmatpush.bf16.msra.mxu0 %v1202
    %1870 = vmatpush.bf16.msra.mxu0 %v1198
    %1871 = vmatpush.bf16.msra.mxu0 %v1194
    %1872 = vmatpush.bf16.msra.mxu0 %v1190
    %1873 = vmatpush.bf16.msra.mxu0 %v1186
    %1874 = vmatmul.bf16.gmra.mxu0 %v338
    %v1875 = vpop.f32.mrf.mxu0
    %v1876 = vadd.f32 %v1863, %v1875
    %v1877 = vpop.f32.mrf.mxu0
    %1878 = vdwg.mxu0
    %1879 = vmatpush.bf16.msra.mxu0 %v1246
    %1880 = vmatpush.bf16.msra.mxu0 %v1242
    %1881 = vmatpush.bf16.msra.mxu0 %v1238
    %1882 = vmatpush.bf16.msra.mxu0 %v1234
    %1883 = vmatpush.bf16.msra.mxu0 %v1230
    %1884 = vmatpush.bf16.msra.mxu0 %v1226
    %1885 = vmatpush.bf16.msra.mxu0 %v1222
    %1886 = vmatpush.bf16.msra.mxu0 %v1218
    %1887 = vmatmul.bf16.gmra.mxu0 %v339
    %v1888 = vpop.f32.mrf.mxu0
    %v1889 = vadd.f32 %v1876, %v1888
    %v1890 = vpop.f32.mrf.mxu0
    %1891 = vdwg.mxu0
    %1892 = vmatpush.bf16.msra.mxu0 %v1278
    %1893 = vmatpush.bf16.msra.mxu0 %v1274
    %1894 = vmatpush.bf16.msra.mxu0 %v1270
    %1895 = vmatpush.bf16.msra.mxu0 %v1266
    %1896 = vmatpush.bf16.msra.mxu0 %v1262
    %1897 = vmatpush.bf16.msra.mxu0 %v1258
    %1898 = vmatpush.bf16.msra.mxu0 %v1254
    %1899 = vmatpush.bf16.msra.mxu0 %v1250
    %1900 = vmatmul.bf16.gmra.mxu0 %v340
    %v1901 = vpop.f32.mrf.mxu0
    %v1902 = vadd.f32 %v1889, %v1901
    %v1903 = vpop.f32.mrf.mxu0
    %1904 = vdwg.mxu0
    %1905 = vmatpush.bf16.msra.mxu0 %v1310
    %1906 = vmatpush.bf16.msra.mxu0 %v1306
    %1907 = vmatpush.bf16.msra.mxu0 %v1302
    %1908 = vmatpush.bf16.msra.mxu0 %v1298
    %1909 = vmatpush.bf16.msra.mxu0 %v1294
    %1910 = vmatpush.bf16.msra.mxu0 %v1290
    %1911 = vmatpush.bf16.msra.mxu0 %v1286
    %1912 = vmatpush.bf16.msra.mxu0 %v1282
    %1913 = vmatmul.bf16.gmra.mxu0 %v341
    %v1914 = vpop.f32.mrf.mxu0
    %v1915 = vadd.f32 %v1902, %v1914
    %v1916 = vpop.f32.mrf.mxu0
    %1917 = vdwg.mxu0
    %1918 = vmatpush.bf16.msra.mxu0 %v1342
    %1919 = vmatpush.bf16.msra.mxu0 %v1338
    %1920 = vmatpush.bf16.msra.mxu0 %v1334
    %1921 = vmatpush.bf16.msra.mxu0 %v1330
    %1922 = vmatpush.bf16.msra.mxu0 %v1326
    %1923 = vmatpush.bf16.msra.mxu0 %v1322
    %1924 = vmatpush.bf16.msra.mxu0 %v1318
    %1925 = vmatpush.bf16.msra.mxu0 %v1314
    %1926 = vmatmul.bf16.gmra.mxu0 %v342
    %v1927 = vpop.f32.mrf.mxu0
    %v1928 = vadd.f32 %v1915, %v1927
    %v1929 = vpop.f32.mrf.mxu0
    %1930 = vdwg.mxu0
    %1931 = vmatpush.bf16.msra.mxu0 %v1374
    %1932 = vmatpush.bf16.msra.mxu0 %v1370
    %1933 = vmatpush.bf16.msra.mxu0 %v1366
    %1934 = vmatpush.bf16.msra.mxu0 %v1362
    %1935 = vmatpush.bf16.msra.mxu0 %v1358
    %1936 = vmatpush.bf16.msra.mxu0 %v1354
    %1937 = vmatpush.bf16.msra.mxu0 %v1350
    %1938 = vmatpush.bf16.msra.mxu0 %v1346
    %1939 = vmatmul.bf16.gmra.mxu0 %v343
    %v1940 = vpop.f32.mrf.mxu0
    %v1941 = vadd.f32 %v1928, %v1940
    %v1942 = vpop.f32.mrf.mxu0
    %1943 = vdwg.mxu0
    %1944 = vmatpush.bf16.msra.mxu0 %v1151
    %1945 = vmatpush.bf16.msra.mxu0 %v1147
    %1946 = vmatpush.bf16.msra.mxu0 %v1143
    %1947 = vmatpush.bf16.msra.mxu0 %v1139
    %1948 = vmatpush.bf16.msra.mxu0 %v1135
    %1949 = vmatpush.bf16.msra.mxu0 %v1131
    %1950 = vmatpush.bf16.msra.mxu0 %v1127
    %1951 = vmatpush.bf16.msra.mxu0 %v1123
    %1952 = vmatmul.bf16.gmra.mxu0 %v336
    %v1953 = vpop.f32.mrf.mxu0
    %v1954 = vadd.f32 %v323, %v1953
    %v1955 = vpop.f32.mrf.mxu0
    %1956 = vdwg.mxu0
    %1957 = vmatpush.bf16.msra.mxu0 %v1183
    %1958 = vmatpush.bf16.msra.mxu0 %v1179
    %1959 = vmatpush.bf16.msra.mxu0 %v1175
    %1960 = vmatpush.bf16.msra.mxu0 %v1171
    %1961 = vmatpush.bf16.msra.mxu0 %v1167
    %1962 = vmatpush.bf16.msra.mxu0 %v1163
    %1963 = vmatpush.bf16.msra.mxu0 %v1159
    %1964 = vmatpush.bf16.msra.mxu0 %v1155
    %1965 = vmatmul.bf16.gmra.mxu0 %v337
    %v1966 = vpop.f32.mrf.mxu0
    %v1967 = vadd.f32 %v1954, %v1966
    %v1968 = vpop.f32.mrf.mxu0
    %1969 = vdwg.mxu0
    %1970 = vmatpush.bf16.msra.mxu0 %v1215
    %1971 = vmatpush.bf16.msra.mxu0 %v1211
    %1972 = vmatpush.bf16.msra.mxu0 %v1207
    %1973 = vmatpush.bf16.msra.mxu0 %v1203
    %1974 = vmatpush.bf16.msra.mxu0 %v1199
    %1975 = vmatpush.bf16.msra.mxu0 %v1195
    %1976 = vmatpush.bf16.msra.mxu0 %v1191
    %1977 = vmatpush.bf16.msra.mxu0 %v1187
    %1978 = vmatmul.bf16.gmra.mxu0 %v338
    %v1979 = vpop.f32.mrf.mxu0
    %v1980 = vadd.f32 %v1967, %v1979
    %v1981 = vpop.f32.mrf.mxu0
    %1982 = vdwg.mxu0
    %1983 = vmatpush.bf16.msra.mxu0 %v1247
    %1984 = vmatpush.bf16.msra.mxu0 %v1243
    %1985 = vmatpush.bf16.msra.mxu0 %v1239
    %1986 = vmatpush.bf16.msra.mxu0 %v1235
    %1987 = vmatpush.bf16.msra.mxu0 %v1231
    %1988 = vmatpush.bf16.msra.mxu0 %v1227
    %1989 = vmatpush.bf16.msra.mxu0 %v1223
    %1990 = vmatpush.bf16.msra.mxu0 %v1219
    %1991 = vmatmul.bf16.gmra.mxu0 %v339
    %v1992 = vpop.f32.mrf.mxu0
    %v1993 = vadd.f32 %v1980, %v1992
    %v1994 = vpop.f32.mrf.mxu0
    %1995 = vdwg.mxu0
    %1996 = vmatpush.bf16.msra.mxu0 %v1279
    %1997 = vmatpush.bf16.msra.mxu0 %v1275
    %1998 = vmatpush.bf16.msra.mxu0 %v1271
    %1999 = vmatpush.bf16.msra.mxu0 %v1267
    %2000 = vmatpush.bf16.msra.mxu0 %v1263
    %2001 = vmatpush.bf16.msra.mxu0 %v1259
    %2002 = vmatpush.bf16.msra.mxu0 %v1255
    %2003 = vmatpush.bf16.msra.mxu0 %v1251
    %2004 = vmatmul.bf16.gmra.mxu0 %v340
    %v2005 = vpop.f32.mrf.mxu0
    %v2006 = vadd.f32 %v1993, %v2005
    %v2007 = vpop.f32.mrf.mxu0
    %2008 = vdwg.mxu0
    %2009 = vmatpush.bf16.msra.mxu0 %v1311
    %2010 = vmatpush.bf16.msra.mxu0 %v1307
    %2011 = vmatpush.bf16.msra.mxu0 %v1303
    %2012 = vmatpush.bf16.msra.mxu0 %v1299
    %2013 = vmatpush.bf16.msra.mxu0 %v1295
    %2014 = vmatpush.bf16.msra.mxu0 %v1291
    %2015 = vmatpush.bf16.msra.mxu0 %v1287
    %2016 = vmatpush.bf16.msra.mxu0 %v1283
    %2017 = vmatmul.bf16.gmra.mxu0 %v341
    %v2018 = vpop.f32.mrf.mxu0
    %v2019 = vadd.f32 %v2006, %v2018
    %v2020 = vpop.f32.mrf.mxu0
    %2021 = vdwg.mxu0
    %2022 = vmatpush.bf16.msra.mxu0 %v1343
    %2023 = vmatpush.bf16.msra.mxu0 %v1339
    %2024 = vmatpush.bf16.msra.mxu0 %v1335
    %2025 = vmatpush.bf16.msra.mxu0 %v1331
    %2026 = vmatpush.bf16.msra.mxu0 %v1327
    %2027 = vmatpush.bf16.msra.mxu0 %v1323
    %2028 = vmatpush.bf16.msra.mxu0 %v1319
    %2029 = vmatpush.bf16.msra.mxu0 %v1315
    %2030 = vmatmul.bf16.gmra.mxu0 %v342
    %v2031 = vpop.f32.mrf.mxu0
    %v2032 = vadd.f32 %v2019, %v2031
    %v2033 = vpop.f32.mrf.mxu0
    %2034 = vdwg.mxu0
    %2035 = vmatpush.bf16.msra.mxu0 %v1375
    %2036 = vmatpush.bf16.msra.mxu0 %v1371
    %2037 = vmatpush.bf16.msra.mxu0 %v1367
    %2038 = vmatpush.bf16.msra.mxu0 %v1363
    %2039 = vmatpush.bf16.msra.mxu0 %v1359
    %2040 = vmatpush.bf16.msra.mxu0 %v1355
    %2041 = vmatpush.bf16.msra.mxu0 %v1351
    %2042 = vmatpush.bf16.msra.mxu0 %v1347
    %2043 = vmatmul.bf16.gmra.mxu0 %v343
    %v2044 = vpop.f32.mrf.mxu0
    %v2045 = vadd.f32 %v2032, %v2044
    %v2046 = vpop.f32.mrf.mxu0
    %2047 = vdwg.mxu0
    %vm2048 = vcmp.gt.f32.partialorder %v1733, 0.0
    %vm2049 = vcmp.gt.f32.partialorder %v1837, 0.0
    %vm2050 = vcmp.gt.f32.partialorder %v1941, 0.0
    %vm2051 = vcmp.gt.f32.partialorder %v2045, 0.0
    %v2052 = vmul.f32 %v1733, 0.2
    %v2053 = vmul.f32 %v1837, 0.2
    %v2054 = vmul.f32 %v1941, 0.2
    %v2055 = vmul.f32 %v2045, 0.2
    %v2056 = vsel %vm2048, %v1733, %v2052
    %v2057 = vsel %vm2049, %v1837, %v2053
    %v2058 = vsel %vm2050, %v1941, %v2054
    %v2059 = vsel %vm2051, %v2045, %v2055
    %v2060 = vpack.c.bf16 %v2056, %v2056
    %v2061 = vpack.c.bf16 %v2057, %v2057
    %v2062 = vpack.c.bf16 %v2058, %v2058
    %v2063 = vpack.c.bf16 %v2059, %v2059
    %v2064 = vld [vmem:[#allocation5] sm:$0xff]
    %v2065 = vld [vmem:[#allocation5 + $0x8] sm:$0xff]
    %v2066 = vld [vmem:[#allocation5 + $0x10] sm:$0xff]
    %v2067 = vld [vmem:[#allocation5 + $0x18] sm:$0xff]
    %v2068 = vld [vmem:[#allocation5 + $0x20] sm:$0xff]
    %v2069 = vld [vmem:[#allocation5 + $0x28] sm:$0xff]
    %v2070 = vld [vmem:[#allocation5 + $0x30] sm:$0xff]
    %v2071 = vld [vmem:[#allocation5 + $0x38] sm:$0xff]
    %v2072 = vld [vmem:[#allocation5 + $0x40] sm:$0xff]
    %v2073 = vld [vmem:[#allocation5 + $0x48] sm:$0xff]
    %v2074 = vld [vmem:[#allocation5 + $0x50] sm:$0xff]
    %v2075 = vld [vmem:[#allocation5 + $0x58] sm:$0xff]
    %v2076 = vld [vmem:[#allocation5 + $0x60] sm:$0xff]
    %v2077 = vld [vmem:[#allocation5 + $0x68] sm:$0xff]
    %v2078 = vld [vmem:[#allocation5 + $0x70] sm:$0xff]
    %v2079 = vld [vmem:[#allocation5 + $0x78] sm:$0xff]
    %v2080 = vld [vmem:[#allocation5 + $0x80] sm:$0xff]
    %v2081 = vld [vmem:[#allocation5 + $0x88] sm:$0xff]
    %v2082 = vld [vmem:[#allocation5 + $0x90] sm:$0xff]
    %v2083 = vld [vmem:[#allocation5 + $0x98] sm:$0xff]
    %v2084 = vld [vmem:[#allocation5 + $0xa0] sm:$0xff]
    %v2085 = vld [vmem:[#allocation5 + $0xa8] sm:$0xff]
    %v2086 = vld [vmem:[#allocation5 + $0xb0] sm:$0xff]
    %v2087 = vld [vmem:[#allocation5 + $0xb8] sm:$0xff]
    %v2088 = vld [vmem:[#allocation5 + $0xc0] sm:$0xff]
    %v2089 = vld [vmem:[#allocation5 + $0xc8] sm:$0xff]
    %v2090 = vld [vmem:[#allocation5 + $0xd0] sm:$0xff]
    %v2091 = vld [vmem:[#allocation5 + $0xd8] sm:$0xff]
    %v2092 = vld [vmem:[#allocation5 + $0xe0] sm:$0xff]
    %v2093 = vld [vmem:[#allocation5 + $0xe8] sm:$0xff]
    %v2094 = vld [vmem:[#allocation5 + $0xf0] sm:$0xff]
    %v2095 = vld [vmem:[#allocation5 + $0xf8] sm:$0xff]
    %v2096 = vld [vmem:[#allocation5 + $0x100] sm:$0xff]
    %v2097 = vld [vmem:[#allocation5 + $0x108] sm:$0xff]
    %v2098 = vld [vmem:[#allocation5 + $0x110] sm:$0xff]
    %v2099 = vld [vmem:[#allocation5 + $0x118] sm:$0xff]
    %v2100 = vld [vmem:[#allocation5 + $0x120] sm:$0xff]
    %v2101 = vld [vmem:[#allocation5 + $0x128] sm:$0xff]
    %v2102 = vld [vmem:[#allocation5 + $0x130] sm:$0xff]
    %v2103 = vld [vmem:[#allocation5 + $0x138] sm:$0xff]
    %v2104 = vld [vmem:[#allocation5 + $0x140] sm:$0xff]
    %v2105 = vld [vmem:[#allocation5 + $0x148] sm:$0xff]
    %v2106 = vld [vmem:[#allocation5 + $0x150] sm:$0xff]
    %v2107 = vld [vmem:[#allocation5 + $0x158] sm:$0xff]
    %v2108 = vld [vmem:[#allocation5 + $0x160] sm:$0xff]
    %v2109 = vld [vmem:[#allocation5 + $0x168] sm:$0xff]
    %v2110 = vld [vmem:[#allocation5 + $0x170] sm:$0xff]
    %v2111 = vld [vmem:[#allocation5 + $0x178] sm:$0xff]
    %v2112 = vld [vmem:[#allocation5 + $0x180] sm:$0xff]
    %v2113 = vld [vmem:[#allocation5 + $0x188] sm:$0xff]
    %v2114 = vld [vmem:[#allocation5 + $0x190] sm:$0xff]
    %v2115 = vld [vmem:[#allocation5 + $0x198] sm:$0xff]
    %v2116 = vld [vmem:[#allocation5 + $0x1a0] sm:$0xff]
    %v2117 = vld [vmem:[#allocation5 + $0x1a8] sm:$0xff]
    %v2118 = vld [vmem:[#allocation5 + $0x1b0] sm:$0xff]
    %v2119 = vld [vmem:[#allocation5 + $0x1b8] sm:$0xff]
    %v2120 = vld [vmem:[#allocation5 + $0x1c0] sm:$0xff]
    %v2121 = vld [vmem:[#allocation5 + $0x1c8] sm:$0xff]
    %v2122 = vld [vmem:[#allocation5 + $0x1d0] sm:$0xff]
    %v2123 = vld [vmem:[#allocation5 + $0x1d8] sm:$0xff]
    %v2124 = vld [vmem:[#allocation5 + $0x1e0] sm:$0xff]
    %v2125 = vld [vmem:[#allocation5 + $0x1e8] sm:$0xff]
    %v2126 = vld [vmem:[#allocation5 + $0x1f0] sm:$0xff]
    %v2127 = vld [vmem:[#allocation5 + $0x1f8] sm:$0xff]
    %v2128 = vld [vmem:[#allocation5 + $0x200] sm:$0xff]
    %v2129 = vld [vmem:[#allocation5 + $0x208] sm:$0xff]
    %v2130 = vld [vmem:[#allocation5 + $0x210] sm:$0xff]
    %v2131 = vld [vmem:[#allocation5 + $0x218] sm:$0xff]
    %v2132 = vld [vmem:[#allocation5 + $0x220] sm:$0xff]
    %v2133 = vld [vmem:[#allocation5 + $0x228] sm:$0xff]
    %v2134 = vld [vmem:[#allocation5 + $0x230] sm:$0xff]
    %v2135 = vld [vmem:[#allocation5 + $0x238] sm:$0xff]
    %v2136 = vld [vmem:[#allocation5 + $0x240] sm:$0xff]
    %v2137 = vld [vmem:[#allocation5 + $0x248] sm:$0xff]
    %v2138 = vld [vmem:[#allocation5 + $0x250] sm:$0xff]
    %v2139 = vld [vmem:[#allocation5 + $0x258] sm:$0xff]
    %v2140 = vld [vmem:[#allocation5 + $0x260] sm:$0xff]
    %v2141 = vld [vmem:[#allocation5 + $0x268] sm:$0xff]
    %v2142 = vld [vmem:[#allocation5 + $0x270] sm:$0xff]
    %v2143 = vld [vmem:[#allocation5 + $0x278] sm:$0xff]
    %v2144 = vld [vmem:[#allocation5 + $0x280] sm:$0xff]
    %v2145 = vld [vmem:[#allocation5 + $0x288] sm:$0xff]
    %v2146 = vld [vmem:[#allocation5 + $0x290] sm:$0xff]
    %v2147 = vld [vmem:[#allocation5 + $0x298] sm:$0xff]
    %v2148 = vld [vmem:[#allocation5 + $0x2a0] sm:$0xff]
    %v2149 = vld [vmem:[#allocation5 + $0x2a8] sm:$0xff]
    %v2150 = vld [vmem:[#allocation5 + $0x2b0] sm:$0xff]
    %v2151 = vld [vmem:[#allocation5 + $0x2b8] sm:$0xff]
    %v2152 = vld [vmem:[#allocation5 + $0x2c0] sm:$0xff]
    %v2153 = vld [vmem:[#allocation5 + $0x2c8] sm:$0xff]
    %v2154 = vld [vmem:[#allocation5 + $0x2d0] sm:$0xff]
    %v2155 = vld [vmem:[#allocation5 + $0x2d8] sm:$0xff]
    %v2156 = vld [vmem:[#allocation5 + $0x2e0] sm:$0xff]
    %v2157 = vld [vmem:[#allocation5 + $0x2e8] sm:$0xff]
    %v2158 = vld [vmem:[#allocation5 + $0x2f0] sm:$0xff]
    %v2159 = vld [vmem:[#allocation5 + $0x2f8] sm:$0xff]
    %v2160 = vld [vmem:[#allocation5 + $0x300] sm:$0xff]
    %v2161 = vld [vmem:[#allocation5 + $0x308] sm:$0xff]
    %v2162 = vld [vmem:[#allocation5 + $0x310] sm:$0xff]
    %v2163 = vld [vmem:[#allocation5 + $0x318] sm:$0xff]
    %v2164 = vld [vmem:[#allocation5 + $0x320] sm:$0xff]
    %v2165 = vld [vmem:[#allocation5 + $0x328] sm:$0xff]
    %v2166 = vld [vmem:[#allocation5 + $0x330] sm:$0xff]
    %v2167 = vld [vmem:[#allocation5 + $0x338] sm:$0xff]
    %v2168 = vld [vmem:[#allocation5 + $0x340] sm:$0xff]
    %v2169 = vld [vmem:[#allocation5 + $0x348] sm:$0xff]
    %v2170 = vld [vmem:[#allocation5 + $0x350] sm:$0xff]
    %v2171 = vld [vmem:[#allocation5 + $0x358] sm:$0xff]
    %v2172 = vld [vmem:[#allocation5 + $0x360] sm:$0xff]
    %v2173 = vld [vmem:[#allocation5 + $0x368] sm:$0xff]
    %v2174 = vld [vmem:[#allocation5 + $0x370] sm:$0xff]
    %v2175 = vld [vmem:[#allocation5 + $0x378] sm:$0xff]
    %v2176 = vld [vmem:[#allocation5 + $0x380] sm:$0xff]
    %v2177 = vld [vmem:[#allocation5 + $0x388] sm:$0xff]
    %v2178 = vld [vmem:[#allocation5 + $0x390] sm:$0xff]
    %v2179 = vld [vmem:[#allocation5 + $0x398] sm:$0xff]
    %v2180 = vld [vmem:[#allocation5 + $0x3a0] sm:$0xff]
    %v2181 = vld [vmem:[#allocation5 + $0x3a8] sm:$0xff]
    %v2182 = vld [vmem:[#allocation5 + $0x3b0] sm:$0xff]
    %v2183 = vld [vmem:[#allocation5 + $0x3b8] sm:$0xff]
    %v2184 = vld [vmem:[#allocation5 + $0x3c0] sm:$0xff]
    %v2185 = vld [vmem:[#allocation5 + $0x3c8] sm:$0xff]
    %v2186 = vld [vmem:[#allocation5 + $0x3d0] sm:$0xff]
    %v2187 = vld [vmem:[#allocation5 + $0x3d8] sm:$0xff]
    %v2188 = vld [vmem:[#allocation5 + $0x3e0] sm:$0xff]
    %v2189 = vld [vmem:[#allocation5 + $0x3e8] sm:$0xff]
    %v2190 = vld [vmem:[#allocation5 + $0x3f0] sm:$0xff]
    %v2191 = vld [vmem:[#allocation5 + $0x3f8] sm:$0xff]
    %v2192 = vperm.slane %v56, 1
    %v2193 = vperm.slane %v57, 1
    %v2194 = vperm.slane %v58, 1
    %v2195 = vperm.slane %v59, 1
    %v2324 = vunpack.c.l.b16 %v2064
    %v2325 = vunpack.c.h.b16 %v2064
    %v2326 = vunpack.c.l.b16 %v2065
    %v2327 = vunpack.c.h.b16 %v2065
    %v2328 = vunpack.c.l.b16 %v2066
    %v2329 = vunpack.c.h.b16 %v2066
    %v2330 = vunpack.c.l.b16 %v2067
    %v2331 = vunpack.c.h.b16 %v2067
    %v2332 = vunpack.c.l.b16 %v2068
    %v2333 = vunpack.c.h.b16 %v2068
    %v2334 = vunpack.c.l.b16 %v2069
    %v2335 = vunpack.c.h.b16 %v2069
    %v2336 = vunpack.c.l.b16 %v2070
    %v2337 = vunpack.c.h.b16 %v2070
    %v2338 = vunpack.c.l.b16 %v2071
    %v2339 = vunpack.c.h.b16 %v2071
    %v2340 = vunpack.c.l.b16 %v2072
    %v2341 = vunpack.c.h.b16 %v2072
    %v2342 = vunpack.c.l.b16 %v2073
    %v2343 = vunpack.c.h.b16 %v2073
    %v2344 = vunpack.c.l.b16 %v2074
    %v2345 = vunpack.c.h.b16 %v2074
    %v2346 = vunpack.c.l.b16 %v2075
    %v2347 = vunpack.c.h.b16 %v2075
    %v2348 = vunpack.c.l.b16 %v2076
    %v2349 = vunpack.c.h.b16 %v2076
    %v2350 = vunpack.c.l.b16 %v2077
    %v2351 = vunpack.c.h.b16 %v2077
    %v2352 = vunpack.c.l.b16 %v2078
    %v2353 = vunpack.c.h.b16 %v2078
    %v2354 = vunpack.c.l.b16 %v2079
    %v2355 = vunpack.c.h.b16 %v2079
    %v2356 = vunpack.c.l.b16 %v2080
    %v2357 = vunpack.c.h.b16 %v2080
    %v2358 = vunpack.c.l.b16 %v2081
    %v2359 = vunpack.c.h.b16 %v2081
    %v2360 = vunpack.c.l.b16 %v2082
    %v2361 = vunpack.c.h.b16 %v2082
    %v2362 = vunpack.c.l.b16 %v2083
    %v2363 = vunpack.c.h.b16 %v2083
    %v2364 = vunpack.c.l.b16 %v2084
    %v2365 = vunpack.c.h.b16 %v2084
    %v2366 = vunpack.c.l.b16 %v2085
    %v2367 = vunpack.c.h.b16 %v2085
    %v2368 = vunpack.c.l.b16 %v2086
    %v2369 = vunpack.c.h.b16 %v2086
    %v2370 = vunpack.c.l.b16 %v2087
    %v2371 = vunpack.c.h.b16 %v2087
    %v2372 = vunpack.c.l.b16 %v2088
    %v2373 = vunpack.c.h.b16 %v2088
    %v2374 = vunpack.c.l.b16 %v2089
    %v2375 = vunpack.c.h.b16 %v2089
    %v2376 = vunpack.c.l.b16 %v2090
    %v2377 = vunpack.c.h.b16 %v2090
    %v2378 = vunpack.c.l.b16 %v2091
    %v2379 = vunpack.c.h.b16 %v2091
    %v2380 = vunpack.c.l.b16 %v2092
    %v2381 = vunpack.c.h.b16 %v2092
    %v2382 = vunpack.c.l.b16 %v2093
    %v2383 = vunpack.c.h.b16 %v2093
    %v2384 = vunpack.c.l.b16 %v2094
    %v2385 = vunpack.c.h.b16 %v2094
    %v2386 = vunpack.c.l.b16 %v2095
    %v2387 = vunpack.c.h.b16 %v2095
    %v2388 = vunpack.c.l.b16 %v2096
    %v2389 = vunpack.c.h.b16 %v2096
    %v2390 = vunpack.c.l.b16 %v2097
    %v2391 = vunpack.c.h.b16 %v2097
    %v2392 = vunpack.c.l.b16 %v2098
    %v2393 = vunpack.c.h.b16 %v2098
    %v2394 = vunpack.c.l.b16 %v2099
    %v2395 = vunpack.c.h.b16 %v2099
    %v2396 = vunpack.c.l.b16 %v2100
    %v2397 = vunpack.c.h.b16 %v2100
    %v2398 = vunpack.c.l.b16 %v2101
    %v2399 = vunpack.c.h.b16 %v2101
    %v2400 = vunpack.c.l.b16 %v2102
    %v2401 = vunpack.c.h.b16 %v2102
    %v2402 = vunpack.c.l.b16 %v2103
    %v2403 = vunpack.c.h.b16 %v2103
    %v2404 = vunpack.c.l.b16 %v2104
    %v2405 = vunpack.c.h.b16 %v2104
    %v2406 = vunpack.c.l.b16 %v2105
    %v2407 = vunpack.c.h.b16 %v2105
    %v2408 = vunpack.c.l.b16 %v2106
    %v2409 = vunpack.c.h.b16 %v2106
    %v2410 = vunpack.c.l.b16 %v2107
    %v2411 = vunpack.c.h.b16 %v2107
    %v2412 = vunpack.c.l.b16 %v2108
    %v2413 = vunpack.c.h.b16 %v2108
    %v2414 = vunpack.c.l.b16 %v2109
    %v2415 = vunpack.c.h.b16 %v2109
    %v2416 = vunpack.c.l.b16 %v2110
    %v2417 = vunpack.c.h.b16 %v2110
    %v2418 = vunpack.c.l.b16 %v2111
    %v2419 = vunpack.c.h.b16 %v2111
    %v2420 = vunpack.c.l.b16 %v2112
    %v2421 = vunpack.c.h.b16 %v2112
    %v2422 = vunpack.c.l.b16 %v2113
    %v2423 = vunpack.c.h.b16 %v2113
    %v2424 = vunpack.c.l.b16 %v2114
    %v2425 = vunpack.c.h.b16 %v2114
    %v2426 = vunpack.c.l.b16 %v2115
    %v2427 = vunpack.c.h.b16 %v2115
    %v2428 = vunpack.c.l.b16 %v2116
    %v2429 = vunpack.c.h.b16 %v2116
    %v2430 = vunpack.c.l.b16 %v2117
    %v2431 = vunpack.c.h.b16 %v2117
    %v2432 = vunpack.c.l.b16 %v2118
    %v2433 = vunpack.c.h.b16 %v2118
    %v2434 = vunpack.c.l.b16 %v2119
    %v2435 = vunpack.c.h.b16 %v2119
    %v2436 = vunpack.c.l.b16 %v2120
    %v2437 = vunpack.c.h.b16 %v2120
    %v2438 = vunpack.c.l.b16 %v2121
    %v2439 = vunpack.c.h.b16 %v2121
    %v2440 = vunpack.c.l.b16 %v2122
    %v2441 = vunpack.c.h.b16 %v2122
    %v2442 = vunpack.c.l.b16 %v2123
    %v2443 = vunpack.c.h.b16 %v2123
    %v2444 = vunpack.c.l.b16 %v2124
    %v2445 = vunpack.c.h.b16 %v2124
    %v2446 = vunpack.c.l.b16 %v2125
    %v2447 = vunpack.c.h.b16 %v2125
    %v2448 = vunpack.c.l.b16 %v2126
    %v2449 = vunpack.c.h.b16 %v2126
    %v2450 = vunpack.c.l.b16 %v2127
    %v2451 = vunpack.c.h.b16 %v2127
    %v2452 = vunpack.c.l.b16 %v2128
    %v2453 = vunpack.c.h.b16 %v2128
    %v2454 = vunpack.c.l.b16 %v2129
    %v2455 = vunpack.c.h.b16 %v2129
    %v2456 = vunpack.c.l.b16 %v2130
    %v2457 = vunpack.c.h.b16 %v2130
    %v2458 = vunpack.c.l.b16 %v2131
    %v2459 = vunpack.c.h.b16 %v2131
    %v2460 = vunpack.c.l.b16 %v2132
    %v2461 = vunpack.c.h.b16 %v2132
    %v2462 = vunpack.c.l.b16 %v2133
    %v2463 = vunpack.c.h.b16 %v2133
    %v2464 = vunpack.c.l.b16 %v2134
    %v2465 = vunpack.c.h.b16 %v2134
    %v2466 = vunpack.c.l.b16 %v2135
    %v2467 = vunpack.c.h.b16 %v2135
    %v2468 = vunpack.c.l.b16 %v2136
    %v2469 = vunpack.c.h.b16 %v2136
    %v2470 = vunpack.c.l.b16 %v2137
    %v2471 = vunpack.c.h.b16 %v2137
    %v2472 = vunpack.c.l.b16 %v2138
    %v2473 = vunpack.c.h.b16 %v2138
    %v2474 = vunpack.c.l.b16 %v2139
    %v2475 = vunpack.c.h.b16 %v2139
    %v2476 = vunpack.c.l.b16 %v2140
    %v2477 = vunpack.c.h.b16 %v2140
    %v2478 = vunpack.c.l.b16 %v2141
    %v2479 = vunpack.c.h.b16 %v2141
    %v2480 = vunpack.c.l.b16 %v2142
    %v2481 = vunpack.c.h.b16 %v2142
    %v2482 = vunpack.c.l.b16 %v2143
    %v2483 = vunpack.c.h.b16 %v2143
    %v2484 = vunpack.c.l.b16 %v2144
    %v2485 = vunpack.c.h.b16 %v2144
    %v2486 = vunpack.c.l.b16 %v2145
    %v2487 = vunpack.c.h.b16 %v2145
    %v2488 = vunpack.c.l.b16 %v2146
    %v2489 = vunpack.c.h.b16 %v2146
    %v2490 = vunpack.c.l.b16 %v2147
    %v2491 = vunpack.c.h.b16 %v2147
    %v2492 = vunpack.c.l.b16 %v2148
    %v2493 = vunpack.c.h.b16 %v2148
    %v2494 = vunpack.c.l.b16 %v2149
    %v2495 = vunpack.c.h.b16 %v2149
    %v2496 = vunpack.c.l.b16 %v2150
    %v2497 = vunpack.c.h.b16 %v2150
    %v2498 = vunpack.c.l.b16 %v2151
    %v2499 = vunpack.c.h.b16 %v2151
    %v2500 = vunpack.c.l.b16 %v2152
    %v2501 = vunpack.c.h.b16 %v2152
    %v2502 = vunpack.c.l.b16 %v2153
    %v2503 = vunpack.c.h.b16 %v2153
    %v2504 = vunpack.c.l.b16 %v2154
    %v2505 = vunpack.c.h.b16 %v2154
    %v2506 = vunpack.c.l.b16 %v2155
    %v2507 = vunpack.c.h.b16 %v2155
    %v2508 = vunpack.c.l.b16 %v2156
    %v2509 = vunpack.c.h.b16 %v2156
    %v2510 = vunpack.c.l.b16 %v2157
    %v2511 = vunpack.c.h.b16 %v2157
    %v2512 = vunpack.c.l.b16 %v2158
    %v2513 = vunpack.c.h.b16 %v2158
    %v2514 = vunpack.c.l.b16 %v2159
    %v2515 = vunpack.c.h.b16 %v2159
    %v2516 = vunpack.c.l.b16 %v2160
    %v2517 = vunpack.c.h.b16 %v2160
    %v2518 = vunpack.c.l.b16 %v2161
    %v2519 = vunpack.c.h.b16 %v2161
    %v2520 = vunpack.c.l.b16 %v2162
    %v2521 = vunpack.c.h.b16 %v2162
    %v2522 = vunpack.c.l.b16 %v2163
    %v2523 = vunpack.c.h.b16 %v2163
    %v2524 = vunpack.c.l.b16 %v2164
    %v2525 = vunpack.c.h.b16 %v2164
    %v2526 = vunpack.c.l.b16 %v2165
    %v2527 = vunpack.c.h.b16 %v2165
    %v2528 = vunpack.c.l.b16 %v2166
    %v2529 = vunpack.c.h.b16 %v2166
    %v2530 = vunpack.c.l.b16 %v2167
    %v2531 = vunpack.c.h.b16 %v2167
    %v2532 = vunpack.c.l.b16 %v2168
    %v2533 = vunpack.c.h.b16 %v2168
    %v2534 = vunpack.c.l.b16 %v2169
    %v2535 = vunpack.c.h.b16 %v2169
    %v2536 = vunpack.c.l.b16 %v2170
    %v2537 = vunpack.c.h.b16 %v2170
    %v2538 = vunpack.c.l.b16 %v2171
    %v2539 = vunpack.c.h.b16 %v2171
    %v2540 = vunpack.c.l.b16 %v2172
    %v2541 = vunpack.c.h.b16 %v2172
    %v2542 = vunpack.c.l.b16 %v2173
    %v2543 = vunpack.c.h.b16 %v2173
    %v2544 = vunpack.c.l.b16 %v2174
    %v2545 = vunpack.c.h.b16 %v2174
    %v2546 = vunpack.c.l.b16 %v2175
    %v2547 = vunpack.c.h.b16 %v2175
    %v2548 = vunpack.c.l.b16 %v2176
    %v2549 = vunpack.c.h.b16 %v2176
    %v2550 = vunpack.c.l.b16 %v2177
    %v2551 = vunpack.c.h.b16 %v2177
    %v2552 = vunpack.c.l.b16 %v2178
    %v2553 = vunpack.c.h.b16 %v2178
    %v2554 = vunpack.c.l.b16 %v2179
    %v2555 = vunpack.c.h.b16 %v2179
    %v2556 = vunpack.c.l.b16 %v2180
    %v2557 = vunpack.c.h.b16 %v2180
    %v2558 = vunpack.c.l.b16 %v2181
    %v2559 = vunpack.c.h.b16 %v2181
    %v2560 = vunpack.c.l.b16 %v2182
    %v2561 = vunpack.c.h.b16 %v2182
    %v2562 = vunpack.c.l.b16 %v2183
    %v2563 = vunpack.c.h.b16 %v2183
    %v2564 = vunpack.c.l.b16 %v2184
    %v2565 = vunpack.c.h.b16 %v2184
    %v2566 = vunpack.c.l.b16 %v2185
    %v2567 = vunpack.c.h.b16 %v2185
    %v2568 = vunpack.c.l.b16 %v2186
    %v2569 = vunpack.c.h.b16 %v2186
    %v2570 = vunpack.c.l.b16 %v2187
    %v2571 = vunpack.c.h.b16 %v2187
    %v2572 = vunpack.c.l.b16 %v2188
    %v2573 = vunpack.c.h.b16 %v2188
    %v2574 = vunpack.c.l.b16 %v2189
    %v2575 = vunpack.c.h.b16 %v2189
    %v2576 = vunpack.c.l.b16 %v2190
    %v2577 = vunpack.c.h.b16 %v2190
    %v2578 = vunpack.c.l.b16 %v2191
    %v2579 = vunpack.c.h.b16 %v2191
    %v2580 = vpack.c.b16 %v2328, %v2324
    %v2581 = vpack.c.b16 %v2329, %v2325
    %v2582 = vpack.c.b16 %v2330, %v2326
    %v2583 = vpack.c.b16 %v2331, %v2327
    %v2584 = vpack.c.b16 %v2336, %v2332
    %v2585 = vpack.c.b16 %v2337, %v2333
    %v2586 = vpack.c.b16 %v2338, %v2334
    %v2587 = vpack.c.b16 %v2339, %v2335
    %v2588 = vpack.c.b16 %v2344, %v2340
    %v2589 = vpack.c.b16 %v2345, %v2341
    %v2590 = vpack.c.b16 %v2346, %v2342
    %v2591 = vpack.c.b16 %v2347, %v2343
    %v2592 = vpack.c.b16 %v2352, %v2348
    %v2593 = vpack.c.b16 %v2353, %v2349
    %v2594 = vpack.c.b16 %v2354, %v2350
    %v2595 = vpack.c.b16 %v2355, %v2351
    %v2596 = vpack.c.b16 %v2360, %v2356
    %v2597 = vpack.c.b16 %v2361, %v2357
    %v2598 = vpack.c.b16 %v2362, %v2358
    %v2599 = vpack.c.b16 %v2363, %v2359
    %v2600 = vpack.c.b16 %v2368, %v2364
    %v2601 = vpack.c.b16 %v2369, %v2365
    %v2602 = vpack.c.b16 %v2370, %v2366
    %v2603 = vpack.c.b16 %v2371, %v2367
    %v2604 = vpack.c.b16 %v2376, %v2372
    %v2605 = vpack.c.b16 %v2377, %v2373
    %v2606 = vpack.c.b16 %v2378, %v2374
    %v2607 = vpack.c.b16 %v2379, %v2375
    %v2608 = vpack.c.b16 %v2384, %v2380
    %v2609 = vpack.c.b16 %v2385, %v2381
    %v2610 = vpack.c.b16 %v2386, %v2382
    %v2611 = vpack.c.b16 %v2387, %v2383
    %v2612 = vpack.c.b16 %v2392, %v2388
    %v2613 = vpack.c.b16 %v2393, %v2389
    %v2614 = vpack.c.b16 %v2394, %v2390
    %v2615 = vpack.c.b16 %v2395, %v2391
    %v2616 = vpack.c.b16 %v2400, %v2396
    %v2617 = vpack.c.b16 %v2401, %v2397
    %v2618 = vpack.c.b16 %v2402, %v2398
    %v2619 = vpack.c.b16 %v2403, %v2399
    %v2620 = vpack.c.b16 %v2408, %v2404
    %v2621 = vpack.c.b16 %v2409, %v2405
    %v2622 = vpack.c.b16 %v2410, %v2406
    %v2623 = vpack.c.b16 %v2411, %v2407
    %v2624 = vpack.c.b16 %v2416, %v2412
    %v2625 = vpack.c.b16 %v2417, %v2413
    %v2626 = vpack.c.b16 %v2418, %v2414
    %v2627 = vpack.c.b16 %v2419, %v2415
    %v2628 = vpack.c.b16 %v2424, %v2420
    %v2629 = vpack.c.b16 %v2425, %v2421
    %v2630 = vpack.c.b16 %v2426, %v2422
    %v2631 = vpack.c.b16 %v2427, %v2423
    %v2632 = vpack.c.b16 %v2432, %v2428
    %v2633 = vpack.c.b16 %v2433, %v2429
    %v2634 = vpack.c.b16 %v2434, %v2430
    %v2635 = vpack.c.b16 %v2435, %v2431
    %v2636 = vpack.c.b16 %v2440, %v2436
    %v2637 = vpack.c.b16 %v2441, %v2437
    %v2638 = vpack.c.b16 %v2442, %v2438
    %v2639 = vpack.c.b16 %v2443, %v2439
    %v2640 = vpack.c.b16 %v2448, %v2444
    %v2641 = vpack.c.b16 %v2449, %v2445
    %v2642 = vpack.c.b16 %v2450, %v2446
    %v2643 = vpack.c.b16 %v2451, %v2447
    %v2644 = vpack.c.b16 %v2456, %v2452
    %v2645 = vpack.c.b16 %v2457, %v2453
    %v2646 = vpack.c.b16 %v2458, %v2454
    %v2647 = vpack.c.b16 %v2459, %v2455
    %v2648 = vpack.c.b16 %v2464, %v2460
    %v2649 = vpack.c.b16 %v2465, %v2461
    %v2650 = vpack.c.b16 %v2466, %v2462
    %v2651 = vpack.c.b16 %v2467, %v2463
    %v2652 = vpack.c.b16 %v2472, %v2468
    %v2653 = vpack.c.b16 %v2473, %v2469
    %v2654 = vpack.c.b16 %v2474, %v2470
    %v2655 = vpack.c.b16 %v2475, %v2471
    %v2656 = vpack.c.b16 %v2480, %v2476
    %v2657 = vpack.c.b16 %v2481, %v2477
    %v2658 = vpack.c.b16 %v2482, %v2478
    %v2659 = vpack.c.b16 %v2483, %v2479
    %v2660 = vpack.c.b16 %v2488, %v2484
    %v2661 = vpack.c.b16 %v2489, %v2485
    %v2662 = vpack.c.b16 %v2490, %v2486
    %v2663 = vpack.c.b16 %v2491, %v2487
    %v2664 = vpack.c.b16 %v2496, %v2492
    %v2665 = vpack.c.b16 %v2497, %v2493
    %v2666 = vpack.c.b16 %v2498, %v2494
    %v2667 = vpack.c.b16 %v2499, %v2495
    %v2668 = vpack.c.b16 %v2504, %v2500
    %v2669 = vpack.c.b16 %v2505, %v2501
    %v2670 = vpack.c.b16 %v2506, %v2502
    %v2671 = vpack.c.b16 %v2507, %v2503
    %v2672 = vpack.c.b16 %v2512, %v2508
    %v2673 = vpack.c.b16 %v2513, %v2509
    %v2674 = vpack.c.b16 %v2514, %v2510
    %v2675 = vpack.c.b16 %v2515, %v2511
    %v2676 = vpack.c.b16 %v2520, %v2516
    %v2677 = vpack.c.b16 %v2521, %v2517
    %v2678 = vpack.c.b16 %v2522, %v2518
    %v2679 = vpack.c.b16 %v2523, %v2519
    %v2680 = vpack.c.b16 %v2528, %v2524
    %v2681 = vpack.c.b16 %v2529, %v2525
    %v2682 = vpack.c.b16 %v2530, %v2526
    %v2683 = vpack.c.b16 %v2531, %v2527
    %v2684 = vpack.c.b16 %v2536, %v2532
    %v2685 = vpack.c.b16 %v2537, %v2533
    %v2686 = vpack.c.b16 %v2538, %v2534
    %v2687 = vpack.c.b16 %v2539, %v2535
    %v2688 = vpack.c.b16 %v2544, %v2540
    %v2689 = vpack.c.b16 %v2545, %v2541
    %v2690 = vpack.c.b16 %v2546, %v2542
    %v2691 = vpack.c.b16 %v2547, %v2543
    %v2692 = vpack.c.b16 %v2552, %v2548
    %v2693 = vpack.c.b16 %v2553, %v2549
    %v2694 = vpack.c.b16 %v2554, %v2550
    %v2695 = vpack.c.b16 %v2555, %v2551
    %v2696 = vpack.c.b16 %v2560, %v2556
    %v2697 = vpack.c.b16 %v2561, %v2557
    %v2698 = vpack.c.b16 %v2562, %v2558
    %v2699 = vpack.c.b16 %v2563, %v2559
    %v2700 = vpack.c.b16 %v2568, %v2564
    %v2701 = vpack.c.b16 %v2569, %v2565
    %v2702 = vpack.c.b16 %v2570, %v2566
    %v2703 = vpack.c.b16 %v2571, %v2567
    %v2704 = vpack.c.b16 %v2576, %v2572
    %v2705 = vpack.c.b16 %v2577, %v2573
    %v2706 = vpack.c.b16 %v2578, %v2574
    %v2707 = vpack.c.b16 %v2579, %v2575
    %2836 = vmatpush.bf16.msra.mxu0 %v2608
    %2837 = vmatpush.bf16.msra.mxu0 %v2604
    %2838 = vmatpush.bf16.msra.mxu0 %v2600
    %2839 = vmatpush.bf16.msra.mxu0 %v2596
    %2840 = vmatpush.bf16.msra.mxu0 %v2592
    %2841 = vmatpush.bf16.msra.mxu0 %v2588
    %2842 = vmatpush.bf16.msra.mxu0 %v2584
    %2843 = vmatpush.bf16.msra.mxu0 %v2580
    %2844 = vmatmul.bf16.gmra.mxu0 %v2060
    %v2845 = vpop.f32.mrf.mxu0
    %v2846 = vadd.f32 %v2192, %v2845
    %v2847 = vpop.f32.mrf.mxu0
    %2848 = vdwg.mxu0
    %2849 = vmatpush.bf16.msra.mxu0 %v2640
    %2850 = vmatpush.bf16.msra.mxu0 %v2636
    %2851 = vmatpush.bf16.msra.mxu0 %v2632
    %2852 = vmatpush.bf16.msra.mxu0 %v2628
    %2853 = vmatpush.bf16.msra.mxu0 %v2624
    %2854 = vmatpush.bf16.msra.mxu0 %v2620
    %2855 = vmatpush.bf16.msra.mxu0 %v2616
    %2856 = vmatpush.bf16.msra.mxu0 %v2612
    %2857 = vmatmul.bf16.gmra.mxu0 %v2061
    %v2858 = vpop.f32.mrf.mxu0
    %v2859 = vadd.f32 %v2846, %v2858
    %v2860 = vpop.f32.mrf.mxu0
    %2861 = vdwg.mxu0
    %2862 = vmatpush.bf16.msra.mxu0 %v2672
    %2863 = vmatpush.bf16.msra.mxu0 %v2668
    %2864 = vmatpush.bf16.msra.mxu0 %v2664
    %2865 = vmatpush.bf16.msra.mxu0 %v2660
    %2866 = vmatpush.bf16.msra.mxu0 %v2656
    %2867 = vmatpush.bf16.msra.mxu0 %v2652
    %2868 = vmatpush.bf16.msra.mxu0 %v2648
    %2869 = vmatpush.bf16.msra.mxu0 %v2644
    %2870 = vmatmul.bf16.gmra.mxu0 %v2062
    %v2871 = vpop.f32.mrf.mxu0
    %v2872 = vadd.f32 %v2859, %v2871
    %v2873 = vpop.f32.mrf.mxu0
    %2874 = vdwg.mxu0
    %2875 = vmatpush.bf16.msra.mxu0 %v2704
    %2876 = vmatpush.bf16.msra.mxu0 %v2700
    %2877 = vmatpush.bf16.msra.mxu0 %v2696
    %2878 = vmatpush.bf16.msra.mxu0 %v2692
    %2879 = vmatpush.bf16.msra.mxu0 %v2688
    %2880 = vmatpush.bf16.msra.mxu0 %v2684
    %2881 = vmatpush.bf16.msra.mxu0 %v2680
    %2882 = vmatpush.bf16.msra.mxu0 %v2676
    %2883 = vmatmul.bf16.gmra.mxu0 %v2063
    %v2884 = vpop.f32.mrf.mxu0
    %v2885 = vadd.f32 %v2872, %v2884
    %v2886 = vpop.f32.mrf.mxu0
    %2887 = vdwg.mxu0
    %2888 = vmatpush.bf16.msra.mxu0 %v2609
    %2889 = vmatpush.bf16.msra.mxu0 %v2605
    %2890 = vmatpush.bf16.msra.mxu0 %v2601
    %2891 = vmatpush.bf16.msra.mxu0 %v2597
    %2892 = vmatpush.bf16.msra.mxu0 %v2593
    %2893 = vmatpush.bf16.msra.mxu0 %v2589
    %2894 = vmatpush.bf16.msra.mxu0 %v2585
    %2895 = vmatpush.bf16.msra.mxu0 %v2581
    %2896 = vmatmul.bf16.gmra.mxu0 %v2060
    %v2897 = vpop.f32.mrf.mxu0
    %v2898 = vadd.f32 %v2193, %v2897
    %v2899 = vpop.f32.mrf.mxu0
    %2900 = vdwg.mxu0
    %2901 = vmatpush.bf16.msra.mxu0 %v2641
    %2902 = vmatpush.bf16.msra.mxu0 %v2637
    %2903 = vmatpush.bf16.msra.mxu0 %v2633
    %2904 = vmatpush.bf16.msra.mxu0 %v2629
    %2905 = vmatpush.bf16.msra.mxu0 %v2625
    %2906 = vmatpush.bf16.msra.mxu0 %v2621
    %2907 = vmatpush.bf16.msra.mxu0 %v2617
    %2908 = vmatpush.bf16.msra.mxu0 %v2613
    %2909 = vmatmul.bf16.gmra.mxu0 %v2061
    %v2910 = vpop.f32.mrf.mxu0
    %v2911 = vadd.f32 %v2898, %v2910
    %v2912 = vpop.f32.mrf.mxu0
    %2913 = vdwg.mxu0
    %2914 = vmatpush.bf16.msra.mxu0 %v2673
    %2915 = vmatpush.bf16.msra.mxu0 %v2669
    %2916 = vmatpush.bf16.msra.mxu0 %v2665
    %2917 = vmatpush.bf16.msra.mxu0 %v2661
    %2918 = vmatpush.bf16.msra.mxu0 %v2657
    %2919 = vmatpush.bf16.msra.mxu0 %v2653
    %2920 = vmatpush.bf16.msra.mxu0 %v2649
    %2921 = vmatpush.bf16.msra.mxu0 %v2645
    %2922 = vmatmul.bf16.gmra.mxu0 %v2062
    %v2923 = vpop.f32.mrf.mxu0
    %v2924 = vadd.f32 %v2911, %v2923
    %v2925 = vpop.f32.mrf.mxu0
    %2926 = vdwg.mxu0
    %2927 = vmatpush.bf16.msra.mxu0 %v2705
    %2928 = vmatpush.bf16.msra.mxu0 %v2701
    %2929 = vmatpush.bf16.msra.mxu0 %v2697
    %2930 = vmatpush.bf16.msra.mxu0 %v2693
    %2931 = vmatpush.bf16.msra.mxu0 %v2689
    %2932 = vmatpush.bf16.msra.mxu0 %v2685
    %2933 = vmatpush.bf16.msra.mxu0 %v2681
    %2934 = vmatpush.bf16.msra.mxu0 %v2677
    %2935 = vmatmul.bf16.gmra.mxu0 %v2063
    %v2936 = vpop.f32.mrf.mxu0
    %v2937 = vadd.f32 %v2924, %v2936
    %v2938 = vpop.f32.mrf.mxu0
    %2939 = vdwg.mxu0
    %2940 = vmatpush.bf16.msra.mxu0 %v2610
    %2941 = vmatpush.bf16.msra.mxu0 %v2606
    %2942 = vmatpush.bf16.msra.mxu0 %v2602
    %2943 = vmatpush.bf16.msra.mxu0 %v2598
    %2944 = vmatpush.bf16.msra.mxu0 %v2594
    %2945 = vmatpush.bf16.msra.mxu0 %v2590
    %2946 = vmatpush.bf16.msra.mxu0 %v2586
    %2947 = vmatpush.bf16.msra.mxu0 %v2582
    %2948 = vmatmul.bf16.gmra.mxu0 %v2060
    %v2949 = vpop.f32.mrf.mxu0
    %v2950 = vadd.f32 %v2194, %v2949
    %v2951 = vpop.f32.mrf.mxu0
    %2952 = vdwg.mxu0
    %2953 = vmatpush.bf16.msra.mxu0 %v2642
    %2954 = vmatpush.bf16.msra.mxu0 %v2638
    %2955 = vmatpush.bf16.msra.mxu0 %v2634
    %2956 = vmatpush.bf16.msra.mxu0 %v2630
    %2957 = vmatpush.bf16.msra.mxu0 %v2626
    %2958 = vmatpush.bf16.msra.mxu0 %v2622
    %2959 = vmatpush.bf16.msra.mxu0 %v2618
    %2960 = vmatpush.bf16.msra.mxu0 %v2614
    %2961 = vmatmul.bf16.gmra.mxu0 %v2061
    %v2962 = vpop.f32.mrf.mxu0
    %v2963 = vadd.f32 %v2950, %v2962
    %v2964 = vpop.f32.mrf.mxu0
    %2965 = vdwg.mxu0
    %2966 = vmatpush.bf16.msra.mxu0 %v2674
    %2967 = vmatpush.bf16.msra.mxu0 %v2670
    %2968 = vmatpush.bf16.msra.mxu0 %v2666
    %2969 = vmatpush.bf16.msra.mxu0 %v2662
    %2970 = vmatpush.bf16.msra.mxu0 %v2658
    %2971 = vmatpush.bf16.msra.mxu0 %v2654
    %2972 = vmatpush.bf16.msra.mxu0 %v2650
    %2973 = vmatpush.bf16.msra.mxu0 %v2646
    %2974 = vmatmul.bf16.gmra.mxu0 %v2062
    %v2975 = vpop.f32.mrf.mxu0
    %v2976 = vadd.f32 %v2963, %v2975
    %v2977 = vpop.f32.mrf.mxu0
    %2978 = vdwg.mxu0
    %2979 = vmatpush.bf16.msra.mxu0 %v2706
    %2980 = vmatpush.bf16.msra.mxu0 %v2702
    %2981 = vmatpush.bf16.msra.mxu0 %v2698
    %2982 = vmatpush.bf16.msra.mxu0 %v2694
    %2983 = vmatpush.bf16.msra.mxu0 %v2690
    %2984 = vmatpush.bf16.msra.mxu0 %v2686
    %2985 = vmatpush.bf16.msra.mxu0 %v2682
    %2986 = vmatpush.bf16.msra.mxu0 %v2678
    %2987 = vmatmul.bf16.gmra.mxu0 %v2063
    %v2988 = vpop.f32.mrf.mxu0
    %v2989 = vadd.f32 %v2976, %v2988
    %v2990 = vpop.f32.mrf.mxu0
    %2991 = vdwg.mxu0
    %2992 = vmatpush.bf16.msra.mxu0 %v2611
    %2993 = vmatpush.bf16.msra.mxu0 %v2607
    %2994 = vmatpush.bf16.msra.mxu0 %v2603
    %2995 = vmatpush.bf16.msra.mxu0 %v2599
    %2996 = vmatpush.bf16.msra.mxu0 %v2595
    %2997 = vmatpush.bf16.msra.mxu0 %v2591
    %2998 = vmatpush.bf16.msra.mxu0 %v2587
    %2999 = vmatpush.bf16.msra.mxu0 %v2583
    %3000 = vmatmul.bf16.gmra.mxu0 %v2060
    %v3001 = vpop.f32.mrf.mxu0
    %v3002 = vadd.f32 %v2195, %v3001
    %v3003 = vpop.f32.mrf.mxu0
    %3004 = vdwg.mxu0
    %3005 = vmatpush.bf16.msra.mxu0 %v2643
    %3006 = vmatpush.bf16.msra.mxu0 %v2639
    %3007 = vmatpush.bf16.msra.mxu0 %v2635
    %3008 = vmatpush.bf16.msra.mxu0 %v2631
    %3009 = vmatpush.bf16.msra.mxu0 %v2627
    %3010 = vmatpush.bf16.msra.mxu0 %v2623
    %3011 = vmatpush.bf16.msra.mxu0 %v2619
    %3012 = vmatpush.bf16.msra.mxu0 %v2615
    %3013 = vmatmul.bf16.gmra.mxu0 %v2061
    %v3014 = vpop.f32.mrf.mxu0
    %v3015 = vadd.f32 %v3002, %v3014
    %v3016 = vpop.f32.mrf.mxu0
    %3017 = vdwg.mxu0
    %3018 = vmatpush.bf16.msra.mxu0 %v2675
    %3019 = vmatpush.bf16.msra.mxu0 %v2671
    %3020 = vmatpush.bf16.msra.mxu0 %v2667
    %3021 = vmatpush.bf16.msra.mxu0 %v2663
    %3022 = vmatpush.bf16.msra.mxu0 %v2659
    %3023 = vmatpush.bf16.msra.mxu0 %v2655
    %3024 = vmatpush.bf16.msra.mxu0 %v2651
    %3025 = vmatpush.bf16.msra.mxu0 %v2647
    %3026 = vmatmul.bf16.gmra.mxu0 %v2062
    %v3027 = vpop.f32.mrf.mxu0
    %v3028 = vadd.f32 %v3015, %v3027
    %v3029 = vpop.f32.mrf.mxu0
    %3030 = vdwg.mxu0
    %3031 = vmatpush.bf16.msra.mxu0 %v2707
    %3032 = vmatpush.bf16.msra.mxu0 %v2703
    %3033 = vmatpush.bf16.msra.mxu0 %v2699
    %3034 = vmatpush.bf16.msra.mxu0 %v2695
    %3035 = vmatpush.bf16.msra.mxu0 %v2691
    %3036 = vmatpush.bf16.msra.mxu0 %v2687
    %3037 = vmatpush.bf16.msra.mxu0 %v2683
    %3038 = vmatpush.bf16.msra.mxu0 %v2679
    %3039 = vmatmul.bf16.gmra.mxu0 %v2063
    %v3040 = vpop.f32.mrf.mxu0
    %v3041 = vadd.f32 %v3028, %v3040
    %v3042 = vpop.f32.mrf.mxu0
    %3043 = vdwg.mxu0
    %v3044 = vrot.slane %v2885, 4
    %v3045 = vadd.f32 %v2885, %v3044
    %v3046 = vrot.slane %v3045, 2
    %v3047 = vadd.f32 %v3045, %v3046
    %v3048 = vrot.slane %v3047, 1
    %v3049 = vadd.f32 %v3047, %v3048
    %v3050 = vrot.slane %v2937, 4
    %v3051 = vadd.f32 %v2937, %v3050
    %v3052 = vrot.slane %v3051, 2
    %v3053 = vadd.f32 %v3051, %v3052
    %v3054 = vrot.slane %v3053, 1
    %v3055 = vadd.f32 %v3053, %v3054
    %v3056 = vrot.slane %v2989, 4
    %v3057 = vadd.f32 %v2989, %v3056
    %v3058 = vrot.slane %v3057, 2
    %v3059 = vadd.f32 %v3057, %v3058
    %v3060 = vrot.slane %v3059, 1
    %v3061 = vadd.f32 %v3059, %v3060
    %v3062 = vrot.slane %v3041, 4
    %v3063 = vadd.f32 %v3041, %v3062
    %v3064 = vrot.slane %v3063, 2
    %v3065 = vadd.f32 %v3063, %v3064
    %v3066 = vrot.slane %v3065, 1
    %v3067 = vadd.f32 %v3065, %v3066
    %v3068 = vrcp.pop 8.0
    %v3069 = vmul.f32 8.0, %v3068
    %v3070 = vsub.f32 1.0, %v3069
    %v3071 = vmul.f32 %v3068, %v3070
    %v3072 = vadd.f32 %v3068, %v3071
    %vm3073 = vweird.f32 %v3068
    %v3074 = vsel %vm3073, %v3068, %v3072
    %v3075 = vmul.f32 %v3049, %v3074
    %v3076 = vmul.f32 %v3055, %v3074
    %v3077 = vmul.f32 %v3061, %v3074
    %v3078 = vmul.f32 %v3067, %v3074
    %v3079 = vsub.f32 %v2885, %v3075
    %v3080 = vsub.f32 %v2937, %v3076
    %v3081 = vsub.f32 %v2989, %v3077
    %v3082 = vsub.f32 %v3041, %v3078
    %v3083 = vmul.f32 %v3079, %v3079
    %v3084 = vmul.f32 %v3080, %v3080
    %v3085 = vmul.f32 %v3081, %v3081
    %v3086 = vmul.f32 %v3082, %v3082
    %v3087 = vrot.slane %v3083, 4
    %v3088 = vadd.f32 %v3083, %v3087
    %v3089 = vrot.slane %v3088, 2
    %v3090 = vadd.f32 %v3088, %v3089
    %v3091 = vrot.slane %v3090, 1
    %v3092 = vadd.f32 %v3090, %v3091
    %v3093 = vrot.slane %v3084, 4
    %v3094 = vadd.f32 %v3084, %v3093
    %v3095 = vrot.slane %v3094, 2
    %v3096 = vadd.f32 %v3094, %v3095
    %v3097 = vrot.slane %v3096, 1
    %v3098 = vadd.f32 %v3096, %v3097
    %v3099 = vrot.slane %v3085, 4
    %v3100 = vadd.f32 %v3085, %v3099
    %v3101 = vrot.slane %v3100, 2
    %v3102 = vadd.f32 %v3100, %v3101
    %v3103 = vrot.slane %v3102, 1
    %v3104 = vadd.f32 %v3102, %v3103
    %v3105 = vrot.slane %v3086, 4
    %v3106 = vadd.f32 %v3086, %v3105
    %v3107 = vrot.slane %v3106, 2
    %v3108 = vadd.f32 %v3106, %v3107
    %v3109 = vrot.slane %v3108, 1
    %v3110 = vadd.f32 %v3108, %v3109
    %v3111 = vmul.f32 %v3092, %v3074
    %v3112 = vmul.f32 %v3098, %v3074
    %v3113 = vmul.f32 %v3104, %v3074
    %v3114 = vmul.f32 %v3110, %v3074
    %v3115 = vadd.f32 %v3111, 1e-05
    %v3116 = vadd.f32 %v3112, 1e-05
    %v3117 = vadd.f32 %v3113, 1e-05
    %v3118 = vadd.f32 %v3114, 1e-05
    %v3119 = vrsqrt.pop %v3115
    %v3120 = vmul.f32 %v3119, %v3115
    %v3121 = vmul.f32 %v3120, %v3119
    %v3122 = vmul.f32 0.5, %v3121
    %v3123 = vsub.f32 1.5, %v3122
    %v3124 = vmul.f32 %v3119, %v3123
    %vm3125 = vweird.f32 %v3115
    %vm3126 = vweird.f32 %v3119
    %vm3127 = vmor %vm3125, %vm3126
    %v3128 = vsel %vm3127, %v3119, %v3124
    %v3129 = vrsqrt.pop %v3116
    %v3130 = vmul.f32 %v3129, %v3116
    %v3131 = vmul.f32 %v3130, %v3129
    %v3132 = vmul.f32 0.5, %v3131
    %v3133 = vsub.f32 1.5, %v3132
    %v3134 = vmul.f32 %v3129, %v3133
    %vm3135 = vweird.f32 %v3116
    %vm3136 = vweird.f32 %v3129
    %vm3137 = vmor %vm3135, %vm3136
    %v3138 = vsel %vm3137, %v3129, %v3134
    %v3139 = vrsqrt.pop %v3117
    %v3140 = vmul.f32 %v3139, %v3117
    %v3141 = vmul.f32 %v3140, %v3139
    %v3142 = vmul.f32 0.5, %v3141
    %v3143 = vsub.f32 1.5, %v3142
    %v3144 = vmul.f32 %v3139, %v3143
    %vm3145 = vweird.f32 %v3117
    %vm3146 = vweird.f32 %v3139
    %vm3147 = vmor %vm3145, %vm3146
    %v3148 = vsel %vm3147, %v3139, %v3144
    %v3149 = vrsqrt.pop %v3118
    %v3150 = vmul.f32 %v3149, %v3118
    %v3151 = vmul.f32 %v3150, %v3149
    %v3152 = vmul.f32 0.5, %v3151
    %v3153 = vsub.f32 1.5, %v3152
    %v3154 = vmul.f32 %v3149, %v3153
    %vm3155 = vweird.f32 %v3118
    %vm3156 = vweird.f32 %v3149
    %vm3157 = vmor %vm3155, %vm3156
    %v3158 = vsel %vm3157, %v3149, %v3154
    %v3159 = vmul.f32 %v3079, %v3128
    %v3160 = vmul.f32 %v3080, %v3138
    %v3161 = vmul.f32 %v3081, %v3148
    %v3162 = vmul.f32 %v3082, %v3158
    %v3163 = vperm.slane %v56, 2
    %v3164 = vperm.slane %v57, 2
    %v3165 = vperm.slane %v58, 2
    %v3166 = vperm.slane %v59, 2
    %v3167 = vmul.f32 %v3159, %v3163
    %v3168 = vmul.f32 %v3160, %v3164
    %v3169 = vmul.f32 %v3161, %v3165
    %v3170 = vmul.f32 %v3162, %v3166
    %v3171 = vperm.slane %v56, 3
    %v3172 = vperm.slane %v57, 3
    %v3173 = vperm.slane %v58, 3
    %v3174 = vperm.slane %v59, 3
    %v3175 = vadd.f32 %v3167, %v3171
    %v3176 = vadd.f32 %v3168, %v3172
    %v3177 = vadd.f32 %v3169, %v3173
    %v3178 = vadd.f32 %v3170, %v3174
    %vm3179 = vcmp.gt.f32.partialorder %v3175, 0.0
    %vm3180 = vcmp.gt.f32.partialorder %v3176, 0.0
    %vm3181 = vcmp.gt.f32.partialorder %v3177, 0.0
    %vm3182 = vcmp.gt.f32.partialorder %v3178, 0.0
    %v3183 = vmul.f32 %v3175, 0.2
    %v3184 = vmul.f32 %v3176, 0.2
    %v3185 = vmul.f32 %v3177, 0.2
    %v3186 = vmul.f32 %v3178, 0.2
    %v3187 = vsel %vm3179, %v3175, %v3183
    %v3188 = vsel %vm3180, %v3176, %v3184
    %v3189 = vsel %vm3181, %v3177, %v3185
    %v3190 = vsel %vm3182, %v3178, %v3186
    %v3191 = vpack.c.bf16 %v3187, %v3187
    %v3192 = vpack.c.bf16 %v3188, %v3188
    %v3193 = vpack.c.bf16 %v3189, %v3189
    %v3194 = vpack.c.bf16 %v3190, %v3190
    %v3195 = vld [vmem:[%s3] sm:$0xf]
    %v3196 = vld [vmem:[%s3 + $0x4] sm:$0xf]
    %v3197 = vld [vmem:[%s3 + $0x8] sm:$0xf]
    %v3198 = vld [vmem:[%s3 + $0xc] sm:$0xf]
    %v3199 = vld [vmem:[%s3 + $0x10] sm:$0xf]
    %v3200 = vld [vmem:[%s3 + $0x14] sm:$0xf]
    %v3201 = vld [vmem:[%s3 + $0x18] sm:$0xf]
    %v3202 = vld [vmem:[%s3 + $0x1c] sm:$0xf]
    %v3203 = vld [vmem:[%s3 + $0x20] sm:$0xf]
    %v3204 = vld [vmem:[%s3 + $0x24] sm:$0xf]
    %v3205 = vld [vmem:[%s3 + $0x28] sm:$0xf]
    %v3206 = vld [vmem:[%s3 + $0x2c] sm:$0xf]
    %v3207 = vld [vmem:[%s3 + $0x30] sm:$0xf]
    %v3208 = vld [vmem:[%s3 + $0x34] sm:$0xf]
    %v3209 = vld [vmem:[%s3 + $0x38] sm:$0xf]
    %v3210 = vld [vmem:[%s3 + $0x3c] sm:$0xf]
    %v3211 = vld [vmem:[%s3 + $0x40] sm:$0xf]
    %v3212 = vld [vmem:[%s3 + $0x44] sm:$0xf]
    %v3213 = vld [vmem:[%s3 + $0x48] sm:$0xf]
    %v3214 = vld [vmem:[%s3 + $0x4c] sm:$0xf]
    %v3215 = vld [vmem:[%s3 + $0x50] sm:$0xf]
    %v3216 = vld [vmem:[%s3 + $0x54] sm:$0xf]
    %v3217 = vld [vmem:[%s3 + $0x58] sm:$0xf]
    %v3218 = vld [vmem:[%s3 + $0x5c] sm:$0xf]
    %v3219 = vld [vmem:[%s3 + $0x60] sm:$0xf]
    %v3220 = vld [vmem:[%s3 + $0x64] sm:$0xf]
    %v3221 = vld [vmem:[%s3 + $0x68] sm:$0xf]
    %v3222 = vld [vmem:[%s3 + $0x6c] sm:$0xf]
    %v3223 = vld [vmem:[%s3 + $0x70] sm:$0xf]
    %v3224 = vld [vmem:[%s3 + $0x74] sm:$0xf]
    %v3225 = vld [vmem:[%s3 + $0x78] sm:$0xf]
    %v3226 = vld [vmem:[%s3 + $0x7c] sm:$0xf]
    %v3227 = vld [vmem:[%s3 + $0x80] sm:$0xf]
    %v3228 = vld [vmem:[%s3 + $0x84] sm:$0xf]
    %v3229 = vld [vmem:[%s3 + $0x88] sm:$0xf]
    %v3230 = vld [vmem:[%s3 + $0x8c] sm:$0xf]
    %v3231 = vld [vmem:[%s3 + $0x90] sm:$0xf]
    %v3232 = vld [vmem:[%s3 + $0x94] sm:$0xf]
    %v3233 = vld [vmem:[%s3 + $0x98] sm:$0xf]
    %v3234 = vld [vmem:[%s3 + $0x9c] sm:$0xf]
    %v3235 = vld [vmem:[%s3 + $0xa0] sm:$0xf]
    %v3236 = vld [vmem:[%s3 + $0xa4] sm:$0xf]
    %v3237 = vld [vmem:[%s3 + $0xa8] sm:$0xf]
    %v3238 = vld [vmem:[%s3 + $0xac] sm:$0xf]
    %v3239 = vld [vmem:[%s3 + $0xb0] sm:$0xf]
    %v3240 = vld [vmem:[%s3 + $0xb4] sm:$0xf]
    %v3241 = vld [vmem:[%s3 + $0xb8] sm:$0xf]
    %v3242 = vld [vmem:[%s3 + $0xbc] sm:$0xf]
    %v3243 = vld [vmem:[%s3 + $0xc0] sm:$0xf]
    %v3244 = vld [vmem:[%s3 + $0xc4] sm:$0xf]
    %v3245 = vld [vmem:[%s3 + $0xc8] sm:$0xf]
    %v3246 = vld [vmem:[%s3 + $0xcc] sm:$0xf]
    %v3247 = vld [vmem:[%s3 + $0xd0] sm:$0xf]
    %v3248 = vld [vmem:[%s3 + $0xd4] sm:$0xf]
    %v3249 = vld [vmem:[%s3 + $0xd8] sm:$0xf]
    %v3250 = vld [vmem:[%s3 + $0xdc] sm:$0xf]
    %v3251 = vld [vmem:[%s3 + $0xe0] sm:$0xf]
    %v3252 = vld [vmem:[%s3 + $0xe4] sm:$0xf]
    %v3253 = vld [vmem:[%s3 + $0xe8] sm:$0xf]
    %v3254 = vld [vmem:[%s3 + $0xec] sm:$0xf]
    %v3255 = vld [vmem:[%s3 + $0xf0] sm:$0xf]
    %v3256 = vld [vmem:[%s3 + $0xf4] sm:$0xf]
    %v3257 = vld [vmem:[%s3 + $0xf8] sm:$0xf]
    %v3258 = vld [vmem:[%s3 + $0xfc] sm:$0xf]
    %v3259 = vperm.slane %v56, 4
    %v3324 = vunpack.c.l.b16 %v3195
    %v3325 = vunpack.c.l.b16 %v3196
    %v3326 = vunpack.c.l.b16 %v3197
    %v3327 = vunpack.c.l.b16 %v3198
    %v3328 = vunpack.c.l.b16 %v3199
    %v3329 = vunpack.c.l.b16 %v3200
    %v3330 = vunpack.c.l.b16 %v3201
    %v3331 = vunpack.c.l.b16 %v3202
    %v3332 = vunpack.c.l.b16 %v3203
    %v3333 = vunpack.c.l.b16 %v3204
    %v3334 = vunpack.c.l.b16 %v3205
    %v3335 = vunpack.c.l.b16 %v3206
    %v3336 = vunpack.c.l.b16 %v3207
    %v3337 = vunpack.c.l.b16 %v3208
    %v3338 = vunpack.c.l.b16 %v3209
    %v3339 = vunpack.c.l.b16 %v3210
    %v3340 = vunpack.c.l.b16 %v3211
    %v3341 = vunpack.c.l.b16 %v3212
    %v3342 = vunpack.c.l.b16 %v3213
    %v3343 = vunpack.c.l.b16 %v3214
    %v3344 = vunpack.c.l.b16 %v3215
    %v3345 = vunpack.c.l.b16 %v3216
    %v3346 = vunpack.c.l.b16 %v3217
    %v3347 = vunpack.c.l.b16 %v3218
    %v3348 = vunpack.c.l.b16 %v3219
    %v3349 = vunpack.c.l.b16 %v3220
    %v3350 = vunpack.c.l.b16 %v3221
    %v3351 = vunpack.c.l.b16 %v3222
    %v3352 = vunpack.c.l.b16 %v3223
    %v3353 = vunpack.c.l.b16 %v3224
    %v3354 = vunpack.c.l.b16 %v3225
    %v3355 = vunpack.c.l.b16 %v3226
    %v3356 = vunpack.c.l.b16 %v3227
    %v3357 = vunpack.c.l.b16 %v3228
    %v3358 = vunpack.c.l.b16 %v3229
    %v3359 = vunpack.c.l.b16 %v3230
    %v3360 = vunpack.c.l.b16 %v3231
    %v3361 = vunpack.c.l.b16 %v3232
    %v3362 = vunpack.c.l.b16 %v3233
    %v3363 = vunpack.c.l.b16 %v3234
    %v3364 = vunpack.c.l.b16 %v3235
    %v3365 = vunpack.c.l.b16 %v3236
    %v3366 = vunpack.c.l.b16 %v3237
    %v3367 = vunpack.c.l.b16 %v3238
    %v3368 = vunpack.c.l.b16 %v3239
    %v3369 = vunpack.c.l.b16 %v3240
    %v3370 = vunpack.c.l.b16 %v3241
    %v3371 = vunpack.c.l.b16 %v3242
    %v3372 = vunpack.c.l.b16 %v3243
    %v3373 = vunpack.c.l.b16 %v3244
    %v3374 = vunpack.c.l.b16 %v3245
    %v3375 = vunpack.c.l.b16 %v3246
    %v3376 = vunpack.c.l.b16 %v3247
    %v3377 = vunpack.c.l.b16 %v3248
    %v3378 = vunpack.c.l.b16 %v3249
    %v3379 = vunpack.c.l.b16 %v3250
    %v3380 = vunpack.c.l.b16 %v3251
    %v3381 = vunpack.c.l.b16 %v3252
    %v3382 = vunpack.c.l.b16 %v3253
    %v3383 = vunpack.c.l.b16 %v3254
    %v3384 = vunpack.c.l.b16 %v3255
    %v3385 = vunpack.c.l.b16 %v3256
    %v3386 = vunpack.c.l.b16 %v3257
    %v3387 = vunpack.c.l.b16 %v3258
    %v3388 = vpack.c.b16 %v3325, %v3324
    %v3389 = vpack.c.b16 %v3327, %v3326
    %v3390 = vpack.c.b16 %v3329, %v3328
    %v3391 = vpack.c.b16 %v3331, %v3330
    %v3392 = vpack.c.b16 %v3333, %v3332
    %v3393 = vpack.c.b16 %v3335, %v3334
    %v3394 = vpack.c.b16 %v3337, %v3336
    %v3395 = vpack.c.b16 %v3339, %v3338
    %v3396 = vpack.c.b16 %v3341, %v3340
    %v3397 = vpack.c.b16 %v3343, %v3342
    %v3398 = vpack.c.b16 %v3345, %v3344
    %v3399 = vpack.c.b16 %v3347, %v3346
    %v3400 = vpack.c.b16 %v3349, %v3348
    %v3401 = vpack.c.b16 %v3351, %v3350
    %v3402 = vpack.c.b16 %v3353, %v3352
    %v3403 = vpack.c.b16 %v3355, %v3354
    %v3404 = vpack.c.b16 %v3357, %v3356
    %v3405 = vpack.c.b16 %v3359, %v3358
    %v3406 = vpack.c.b16 %v3361, %v3360
    %v3407 = vpack.c.b16 %v3363, %v3362
    %v3408 = vpack.c.b16 %v3365, %v3364
    %v3409 = vpack.c.b16 %v3367, %v3366
    %v3410 = vpack.c.b16 %v3369, %v3368
    %v3411 = vpack.c.b16 %v3371, %v3370
    %v3412 = vpack.c.b16 %v3373, %v3372
    %v3413 = vpack.c.b16 %v3375, %v3374
    %v3414 = vpack.c.b16 %v3377, %v3376
    %v3415 = vpack.c.b16 %v3379, %v3378
    %v3416 = vpack.c.b16 %v3381, %v3380
    %v3417 = vpack.c.b16 %v3383, %v3382
    %v3418 = vpack.c.b16 %v3385, %v3384
    %v3419 = vpack.c.b16 %v3387, %v3386
    %3452 = vmatpush.bf16.msra.mxu0 %v3395
    %3453 = vmatpush.bf16.msra.mxu0 %v3394
    %3454 = vmatpush.bf16.msra.mxu0 %v3393
    %3455 = vmatpush.bf16.msra.mxu0 %v3392
    %3456 = vmatpush.bf16.msra.mxu0 %v3391
    %3457 = vmatpush.bf16.msra.mxu0 %v3390
    %3458 = vmatpush.bf16.msra.mxu0 %v3389
    %3459 = vmatpush.bf16.msra.mxu0 %v3388
    %3460 = vmatmul.bf16.gmra.mxu0 %v3191
    %v3461 = vpop.f32.mrf.mxu0
    %v3462 = vadd.f32 %v3259, %v3461
    %v3463 = vpop.f32.mrf.mxu0
    %3464 = vdwg.mxu0
    %3465 = vmatpush.bf16.msra.mxu0 %v3403
    %3466 = vmatpush.bf16.msra.mxu0 %v3402
    %3467 = vmatpush.bf16.msra.mxu0 %v3401
    %3468 = vmatpush.bf16.msra.mxu0 %v3400
    %3469 = vmatpush.bf16.msra.mxu0 %v3399
    %3470 = vmatpush.bf16.msra.mxu0 %v3398
    %3471 = vmatpush.bf16.msra.mxu0 %v3397
    %3472 = vmatpush.bf16.msra.mxu0 %v3396
    %3473 = vmatmul.bf16.gmra.mxu0 %v3192
    %v3474 = vpop.f32.mrf.mxu0
    %v3475 = vadd.f32 %v3462, %v3474
    %v3476 = vpop.f32.mrf.mxu0
    %3477 = vdwg.mxu0
    %3478 = vmatpush.bf16.msra.mxu0 %v3411
    %3479 = vmatpush.bf16.msra.mxu0 %v3410
    %3480 = vmatpush.bf16.msra.mxu0 %v3409
    %3481 = vmatpush.bf16.msra.mxu0 %v3408
    %3482 = vmatpush.bf16.msra.mxu0 %v3407
    %3483 = vmatpush.bf16.msra.mxu0 %v3406
    %3484 = vmatpush.bf16.msra.mxu0 %v3405
    %3485 = vmatpush.bf16.msra.mxu0 %v3404
    %3486 = vmatmul.bf16.gmra.mxu0 %v3193
    %v3487 = vpop.f32.mrf.mxu0
    %v3488 = vadd.f32 %v3475, %v3487
    %v3489 = vpop.f32.mrf.mxu0
    %3490 = vdwg.mxu0
    %3491 = vmatpush.bf16.msra.mxu0 %v3419
    %3492 = vmatpush.bf16.msra.mxu0 %v3418
    %3493 = vmatpush.bf16.msra.mxu0 %v3417
    %3494 = vmatpush.bf16.msra.mxu0 %v3416
    %3495 = vmatpush.bf16.msra.mxu0 %v3415
    %3496 = vmatpush.bf16.msra.mxu0 %v3414
    %3497 = vmatpush.bf16.msra.mxu0 %v3413
    %3498 = vmatpush.bf16.msra.mxu0 %v3412
    %3499 = vmatmul.bf16.gmra.mxu0 %v3194
    %v3500 = vpop.f32.mrf.mxu0
    %v3501 = vadd.f32 %v3488, %v3500
    %v3502 = vpop.f32.mrf.mxu0
    %3503 = vdwg.mxu0
    %v3504 = vld [vmem:[%s5] sm:$0xff]
    %v3505 = vmul.f32 %v3501, 0.5
    %v3506 = vmul.f32 %v3505, 1.442695
    %v3507 = vpow.pop %v3506
    %3509 = vrot.lane.b32.xlu0 %v3507, 96
    %v3510 = vpop.permute.xlu0 %3509
    %v3512 = vmul.f32 %v3504, %v3510
    %v3513 = vadd.f32 %v3512, %v3501
    %vm3514 = vcmask 261120
    %3515 = vst.msk [vmem:[#allocation7] sm:$0xff] %vm3514, %v3513
    // Predicated region
    $region34: #{tpu_custom_call.1} parent=1 // pred_check
      _
    $region35: #{tpu_custom_call.1} parent=1 // pred_check_branch
      %3517 = sbr.rel (0) target = $region37
    $region36: #{tpu_custom_call.1} parent=1 // pred_region
      %3519 = vsyncadd [#allocation4], 0
      %s3521 = sshll.u32 [#allocation7], 4
      %s3522 = int_to_ptr.vmem [resolvable:$true] %s3521
      %s3523 = sshll.u32 %s6, 4
      %s3524 = int_to_ptr.hbm [resolvable:$true] %s3523
      %3526 = dma.vmem_to_hbm [thread:$0]  %s3522, 128, %s3524, [#allocation4]
    $region37: #{tpu_custom_call.1} parent=1 // pred_fallthru
      _
    // Predicated region
    $region38: #{tpu_custom_call.1} parent=1 // pred_check
      _
    $region39: #{tpu_custom_call.1} parent=1 // pred_check_branch
      %3528 = sbr.rel (0) target = $region41
    $region40: #{tpu_custom_call.1} parent=1 // pred_region
      %3530 = dma.done [#allocation4], 128
    $region41: #{tpu_custom_call.1} parent=1 // pred_fallthru
      _
    %3531 = vsyncpa [#allocation3], 1
    %3532 = vsyncpa [#allocation6], 1
    %3533 = vsyncpa [#allocation4], 1

</llo_original>
